<compile_context>
chip_gen: v6e
topology: v6e:2x2x1
jax: 0.10.0
libtpu: 0.0.40
codegen_flags: <defaults>
</compile_context>

<pallas_src>
import functools

import jax
import jax.numpy as jnp
from jax import lax
from jax.experimental import pallas as pl
from jax.experimental.pallas import tpu as pltpu


def _compute_loss_kernel(pred_ref, labels_smem_ref, labels_col_ref, labels_row_ref,
                         feat_ref, centers_hbm_ref,
                         cls_ref, tlp_ref, cnt_ref,
                         gath_ref, gath_sem,
                         *, label_smoothing, margin, cnt_weight):
    B, C = pred_ref.shape

    # ------------------------------------------------------------------
    # 0) Kick off the center-row gather DMAs immediately so the HBM->VMEM
    #    copies overlap the CE / triplet compute below.  Only the B rows
    #    centers[labels[i]] ever survive the PyTorch mask, so we never
    #    materialize the (B, C) distmat nor hold (C, D) centers in VMEM.
    # ------------------------------------------------------------------
    for i in range(B):
        lbl = labels_smem_ref[i]
        pltpu.make_async_copy(
            centers_hbm_ref.at[pl.ds(lbl, 1), :],
            gath_ref.at[pl.ds(i, 1), :],
            gath_sem.at[i],
        ).start()

    pred = pred_ref[...].astype(jnp.float32)          # (B, C)
    feat = feat_ref[...].astype(jnp.float32)          # (B, D)
    labels_col = labels_col_ref[...]                  # (B, 1) int32
    labels_row = labels_row_ref[...]                  # (1, B) int32

    # ---------- cls loss: CrossEntropyLoss(label_smoothing)(softmax(pred), labels) ----------
    # PyTorch applies softmax(pred) first, then CE (which applies log_softmax
    # internally).  The double softmax is reproduced deliberately for parity.
    pmax = jnp.max(pred, axis=1, keepdims=True)
    e = jnp.exp(pred - pmax)
    z = e / jnp.sum(e, axis=1, keepdims=True)                              # softmax(pred)
    zmax = jnp.max(z, axis=1, keepdims=True)
    logp = (z - zmax) - jnp.log(jnp.sum(jnp.exp(z - zmax), axis=1, keepdims=True))

    classes = lax.broadcasted_iota(jnp.int32, (B, C), 1)                   # (B, C)
    onehot = classes == labels_col                                         # (B, C) bool
    # Decomposed smoothed-CE (never materializes the q tensor):
    #   -sum(q * logp) = -(1-ls) * sum_i logp[i, label_i] - (ls/C) * sum(logp)
    lab_lsum = jnp.sum(jnp.where(onehot, logp, 0.0), axis=1, keepdims=True)  # (B, 1)
    row_lsum = jnp.sum(logp, axis=1, keepdims=True)                          # (B, 1)
    cls = -((1.0 - label_smoothing) * jnp.sum(lab_lsum, keepdims=True)
            + (label_smoothing / C) * jnp.sum(row_lsum, keepdims=True)) / B
    cls_ref[...] = cls                                                       # (1, 1)

    # ---------- triplet loss (batch-hard, MarginRankingLoss margin=0.3, y=1) ----------
    sq = jnp.sum(feat * feat, axis=1, keepdims=True)                        # (B, 1)
    # Contract dim 1 against dim 1: MXU is fed directly from the natural (rows, D)
    # layout, no explicit transpose / layout copy.
    gram = lax.dot_general(feat, feat,
                           dimension_numbers=(((1,), (1,)), ((), ())),
                           preferred_element_type=jnp.float32)               # (B, B)
    d2 = sq + sq.T - 2.0 * gram
    dist = jnp.sqrt(jnp.maximum(d2, 1e-12))                                  # (B, B)
    same = labels_col == labels_row                                          # (B, B) bool
    dist_ap = jnp.max(jnp.where(same, dist, -jnp.inf), axis=1, keepdims=True)  # hardest pos
    dist_an = jnp.min(jnp.where(same, jnp.inf, dist), axis=1, keepdims=True)   # hardest neg
    hinge = jnp.maximum(dist_ap - dist_an + margin, 0.0)
    tlp_ref[...] = jnp.sum(hinge, keepdims=True) / B                         # (1, 1)

    # ---------- center loss * cnt_weight (gathered rows only) ----------
    # Wait for the B gathered rows (only shape + semaphore matter for wait()).
    for i in range(B):
        pltpu.make_async_copy(
            centers_hbm_ref.at[pl.ds(0, 1), :],
            gath_ref.at[pl.ds(i, 1), :],
            gath_sem.at[i],
        ).wait()
    centers_sel = gath_ref[...].astype(jnp.float32)                          # (B, D)
    diffc = feat - centers_sel
    dist_c = jnp.clip(jnp.sum(diffc * diffc, axis=1, keepdims=True), 1e-12, 1e12)  # (B, 1)
    # PyTorch clamp-after-mask quirk: each of the (C-1) masked-out entries per row is
    # clamped up to 1e-12 and still summed -> add the constant analytically.
    cnt = (jnp.sum(dist_c, keepdims=True) / B + (C - 1) * 1e-12) * cnt_weight
    cnt_ref[...] = cnt                                                       # (1, 1)


def compute_loss(pred, labels, feat, centers, *,
                 label_smoothing=0.1, margin=0.3, cnt_weight=0.0005):
    B, C = pred.shape
    D = feat.shape[1]
    labels_i32 = labels.astype(jnp.int32).reshape(B)

    kernel = functools.partial(_compute_loss_kernel,
                               label_smoothing=float(label_smoothing),
                               margin=float(margin),
                               cnt_weight=float(cnt_weight))

    cost = pl.CostEstimate(
        flops=2 * B * B * D + 10 * B * C + 8 * B * D + 8 * B * B,
        transcendentals=2 * B * C + 2 * B + B * B,
        bytes_accessed=4 * (B * C + 2 * B * D + 4 * B + 3),
    )

    cls, tlp, cnt = pl.pallas_call(
        kernel,
        out_shape=(jax.ShapeDtypeStruct((1, 1), jnp.float32),
                   jax.ShapeDtypeStruct((1, 1), jnp.float32),
                   jax.ShapeDtypeStruct((1, 1), jnp.float32)),
        in_specs=[
            pl.BlockSpec(memory_space=pltpu.MemorySpace.VMEM),   # pred  (B, C)
            pl.BlockSpec(memory_space=pltpu.MemorySpace.SMEM),   # labels (B,) -> DMA addressing
            pl.BlockSpec(memory_space=pltpu.MemorySpace.VMEM),   # labels (B, 1)
            pl.BlockSpec(memory_space=pltpu.MemorySpace.VMEM),   # labels (1, B)
            pl.BlockSpec(memory_space=pltpu.MemorySpace.VMEM),   # feat  (B, D)
            pl.BlockSpec(memory_space=pl.ANY),                   # centers stay in HBM
        ],
        out_specs=(pl.BlockSpec(memory_space=pltpu.MemorySpace.VMEM),) * 3,
        scratch_shapes=[pltpu.VMEM((B, D), jnp.float32),          # gathered centers[labels]
                        pltpu.SemaphoreType.DMA((B,))],
        compiler_params=pltpu.CompilerParams(vmem_limit_bytes=32 * 1024 * 1024),
        cost_estimate=cost,
    )(pred.astype(jnp.float32), labels_i32,
      labels_i32.reshape(B, 1), labels_i32.reshape(1, B),
      feat.astype(jnp.float32), centers.astype(jnp.float32))
    return cls[0, 0], tlp[0, 0], cnt[0, 0]


# ---------------- plain-JAX reference (faithful to the PyTorch code) ----------------
def compute_loss_ref(pred, labels, feat, centers, *,
                     label_smoothing=0.1, margin=0.3, cnt_weight=0.0005):
    B, C = pred.shape
    z = jax.nn.softmax(pred, axis=1)
    logp = jax.nn.log_softmax(z, axis=1)
    onehot = jax.nn.one_hot(labels, C, dtype=jnp.float32)
    q = (1.0 - label_smoothing) * onehot + label_smoothing / C
    cls = -jnp.sum(q * logp) / B

    sq = jnp.sum(feat * feat, axis=1, keepdims=True)
    d2 = sq + sq.T - 2.0 * feat @ feat.T
    dist = jnp.sqrt(jnp.maximum(d2, 1e-12))
    same = labels[:, None] == labels[None, :]
    dist_ap = jnp.max(jnp.where(same, dist, -jnp.inf), axis=1)
    dist_an = jnp.min(jnp.where(same, jnp.inf, dist), axis=1)
    tlp = jnp.mean(jnp.maximum(dist_ap - dist_an + margin, 0.0))

    csq = jnp.sum(centers * centers, axis=1, keepdims=True)
    distmat = sq + csq.T - 2.0 * feat @ centers.T
    cnt = jnp.sum(jnp.clip(distmat * onehot, 1e-12, 1e12)) / B * cnt_weight
    return cls, tlp, cnt


if __name__ == "__main__":
    B, num_classes, feat_dim = 8, 16, 32
    label_smoothing = 0.1

    key = jax.random.PRNGKey(0)
    k_pred, k_feat, k_cent = jax.random.split(key, 3)
    pred = jax.random.normal(k_pred, (B, num_classes), dtype=jnp.float32)
    feat = jax.random.normal(k_feat, (B, feat_dim), dtype=jnp.float32)
    # deterministic init for the CenterLoss parameter (torch.randn(num_classes, feat_dim))
    centers = jax.random.normal(k_cent, (num_classes, feat_dim), dtype=jnp.float32)
    # each label has >=1 positive and >=1 negative in the batch
    labels = jnp.array([0, 1, 2, 3, 0, 1, 2, 3], dtype=jnp.int32)

    cls_loss, tlp_loss, cnt_loss = compute_loss(
        pred, labels, feat, centers,
        label_smoothing=label_smoothing, margin=0.3, cnt_weight=0.0005)
    jax.block_until_ready((cls_loss, tlp_loss, cnt_loss))

    cls_r, tlp_r, cnt_r = compute_loss_ref(
        pred, labels, feat, centers,
        label_smoothing=label_smoothing, margin=0.3, cnt_weight=0.0005)

    import numpy as np
    np.testing.assert_allclose(np.asarray(cls_loss), np.asarray(cls_r), rtol=1e-2, atol=1e-3)
    np.testing.assert_allclose(np.asarray(tlp_loss), np.asarray(tlp_r), rtol=1e-2, atol=1e-3)
    np.testing.assert_allclose(np.asarray(cnt_loss), np.asarray(cnt_r), rtol=1e-2, atol=1e-3)

    print("KERNEL_OK")
</pallas_src>

<mosaic_0001>
module attributes {stable_mosaic.version = 11 : i64} {
  func.func @_compute_loss_kernel(%arg0: memref<8x16xf32, #tpu.memory_space<vmem>>, %arg1: memref<8xi32, #tpu.memory_space<smem>>, %arg2: memref<8x1xi32, #tpu.memory_space<vmem>>, %arg3: memref<1x8xi32, #tpu.memory_space<vmem>>, %arg4: memref<8x32xf32, #tpu.memory_space<vmem>>, %arg5: memref<16x32xf32, #tpu.memory_space<any>>, %arg6: memref<1x1xf32, #tpu.memory_space<vmem>>, %arg7: memref<1x1xf32, #tpu.memory_space<vmem>>, %arg8: memref<1x1xf32, #tpu.memory_space<vmem>>, %arg9: memref<8x32xf32, #tpu.memory_space<vmem>>, %arg10: memref<8x!tpu.dma_semaphore, #tpu.memory_space<semaphore_mem>>) attributes {dimension_semantics = [], scalar_prefetch = 0 : i64, scratch_operands = 2 : i64, tpu.core_type = #tpu.core_type<tc>} {
    %c0 = arith.constant 0 : index
    %0 = memref.load %arg1[%c0] : memref<8xi32, #tpu.memory_space<smem>>
    %c0_i32 = arith.constant 0 : i32
    %c0_i32_0 = arith.constant 0 : i32
    %1 = tpu.memref_slice %arg5[%0, %c0_i32_0] : memref<16x32xf32, #tpu.memory_space<any>> -> memref<1x32xf32, #tpu.memory_space<any>>
    %c0_i32_1 = arith.constant 0 : i32
    %c0_i32_2 = arith.constant 0 : i32
    %2 = tpu.memref_slice %arg9[%c0_i32_1, %c0_i32_2] : memref<8x32xf32, #tpu.memory_space<vmem>> -> memref<1x32xf32, #tpu.memory_space<vmem>>
    %3 = tpu.memref_slice %arg10[%c0_i32] : memref<8x!tpu.dma_semaphore, #tpu.memory_space<semaphore_mem>> -> memref<1x!tpu.dma_semaphore, #tpu.memory_space<semaphore_mem>>
    %4 = tpu.memref_squeeze %3 : memref<1x!tpu.dma_semaphore, #tpu.memory_space<semaphore_mem>> -> memref<!tpu.dma_semaphore, #tpu.memory_space<semaphore_mem>>
    tpu.enqueue_dma source(%1 : memref<1x32xf32, #tpu.memory_space<any>>) target(%2 : memref<1x32xf32, #tpu.memory_space<vmem>>) target_semaphore(%4 : memref<!tpu.dma_semaphore, #tpu.memory_space<semaphore_mem>>)
    %c1 = arith.constant 1 : index
    %5 = memref.load %arg1[%c1] : memref<8xi32, #tpu.memory_space<smem>>
    %c1_i32 = arith.constant 1 : i32
    %c0_i32_3 = arith.constant 0 : i32
    %6 = tpu.memref_slice %arg5[%5, %c0_i32_3] : memref<16x32xf32, #tpu.memory_space<any>> -> memref<1x32xf32, #tpu.memory_space<any>>
    %c1_i32_4 = arith.constant 1 : i32
    %c0_i32_5 = arith.constant 0 : i32
    %7 = tpu.memref_slice %arg9[%c1_i32_4, %c0_i32_5] : memref<8x32xf32, #tpu.memory_space<vmem>> -> memref<1x32xf32, #tpu.memory_space<vmem>>
    %8 = tpu.memref_slice %arg10[%c1_i32] : memref<8x!tpu.dma_semaphore, #tpu.memory_space<semaphore_mem>> -> memref<1x!tpu.dma_semaphore, #tpu.memory_space<semaphore_mem>>
    %9 = tpu.memref_squeeze %8 : memref<1x!tpu.dma_semaphore, #tpu.memory_space<semaphore_mem>> -> memref<!tpu.dma_semaphore, #tpu.memory_space<semaphore_mem>>
    tpu.enqueue_dma source(%6 : memref<1x32xf32, #tpu.memory_space<any>>) target(%7 : memref<1x32xf32, #tpu.memory_space<vmem>>) target_semaphore(%9 : memref<!tpu.dma_semaphore, #tpu.memory_space<semaphore_mem>>)
    %c2 = arith.constant 2 : index
    %10 = memref.load %arg1[%c2] : memref<8xi32, #tpu.memory_space<smem>>
    %c2_i32 = arith.constant 2 : i32
    %c0_i32_6 = arith.constant 0 : i32
    %11 = tpu.memref_slice %arg5[%10, %c0_i32_6] : memref<16x32xf32, #tpu.memory_space<any>> -> memref<1x32xf32, #tpu.memory_space<any>>
    %c2_i32_7 = arith.constant 2 : i32
    %c0_i32_8 = arith.constant 0 : i32
    %12 = tpu.memref_slice %arg9[%c2_i32_7, %c0_i32_8] : memref<8x32xf32, #tpu.memory_space<vmem>> -> memref<1x32xf32, #tpu.memory_space<vmem>>
    %13 = tpu.memref_slice %arg10[%c2_i32] : memref<8x!tpu.dma_semaphore, #tpu.memory_space<semaphore_mem>> -> memref<1x!tpu.dma_semaphore, #tpu.memory_space<semaphore_mem>>
    %14 = tpu.memref_squeeze %13 : memref<1x!tpu.dma_semaphore, #tpu.memory_space<semaphore_mem>> -> memref<!tpu.dma_semaphore, #tpu.memory_space<semaphore_mem>>
    tpu.enqueue_dma source(%11 : memref<1x32xf32, #tpu.memory_space<any>>) target(%12 : memref<1x32xf32, #tpu.memory_space<vmem>>) target_semaphore(%14 : memref<!tpu.dma_semaphore, #tpu.memory_space<semaphore_mem>>)
    %c3 = arith.constant 3 : index
    %15 = memref.load %arg1[%c3] : memref<8xi32, #tpu.memory_space<smem>>
    %c3_i32 = arith.constant 3 : i32
    %c0_i32_9 = arith.constant 0 : i32
    %16 = tpu.memref_slice %arg5[%15, %c0_i32_9] : memref<16x32xf32, #tpu.memory_space<any>> -> memref<1x32xf32, #tpu.memory_space<any>>
    %c3_i32_10 = arith.constant 3 : i32
    %c0_i32_11 = arith.constant 0 : i32
    %17 = tpu.memref_slice %arg9[%c3_i32_10, %c0_i32_11] : memref<8x32xf32, #tpu.memory_space<vmem>> -> memref<1x32xf32, #tpu.memory_space<vmem>>
    %18 = tpu.memref_slice %arg10[%c3_i32] : memref<8x!tpu.dma_semaphore, #tpu.memory_space<semaphore_mem>> -> memref<1x!tpu.dma_semaphore, #tpu.memory_space<semaphore_mem>>
    %19 = tpu.memref_squeeze %18 : memref<1x!tpu.dma_semaphore, #tpu.memory_space<semaphore_mem>> -> memref<!tpu.dma_semaphore, #tpu.memory_space<semaphore_mem>>
    tpu.enqueue_dma source(%16 : memref<1x32xf32, #tpu.memory_space<any>>) target(%17 : memref<1x32xf32, #tpu.memory_space<vmem>>) target_semaphore(%19 : memref<!tpu.dma_semaphore, #tpu.memory_space<semaphore_mem>>)
    %c4 = arith.constant 4 : index
    %20 = memref.load %arg1[%c4] : memref<8xi32, #tpu.memory_space<smem>>
    %c4_i32 = arith.constant 4 : i32
    %c0_i32_12 = arith.constant 0 : i32
    %21 = tpu.memref_slice %arg5[%20, %c0_i32_12] : memref<16x32xf32, #tpu.memory_space<any>> -> memref<1x32xf32, #tpu.memory_space<any>>
    %c4_i32_13 = arith.constant 4 : i32
    %c0_i32_14 = arith.constant 0 : i32
    %22 = tpu.memref_slice %arg9[%c4_i32_13, %c0_i32_14] : memref<8x32xf32, #tpu.memory_space<vmem>> -> memref<1x32xf32, #tpu.memory_space<vmem>>
    %23 = tpu.memref_slice %arg10[%c4_i32] : memref<8x!tpu.dma_semaphore, #tpu.memory_space<semaphore_mem>> -> memref<1x!tpu.dma_semaphore, #tpu.memory_space<semaphore_mem>>
    %24 = tpu.memref_squeeze %23 : memref<1x!tpu.dma_semaphore, #tpu.memory_space<semaphore_mem>> -> memref<!tpu.dma_semaphore, #tpu.memory_space<semaphore_mem>>
    tpu.enqueue_dma source(%21 : memref<1x32xf32, #tpu.memory_space<any>>) target(%22 : memref<1x32xf32, #tpu.memory_space<vmem>>) target_semaphore(%24 : memref<!tpu.dma_semaphore, #tpu.memory_space<semaphore_mem>>)
    %c5 = arith.constant 5 : index
    %25 = memref.load %arg1[%c5] : memref<8xi32, #tpu.memory_space<smem>>
    %c5_i32 = arith.constant 5 : i32
    %c0_i32_15 = arith.constant 0 : i32
    %26 = tpu.memref_slice %arg5[%25, %c0_i32_15] : memref<16x32xf32, #tpu.memory_space<any>> -> memref<1x32xf32, #tpu.memory_space<any>>
    %c5_i32_16 = arith.constant 5 : i32
    %c0_i32_17 = arith.constant 0 : i32
    %27 = tpu.memref_slice %arg9[%c5_i32_16, %c0_i32_17] : memref<8x32xf32, #tpu.memory_space<vmem>> -> memref<1x32xf32, #tpu.memory_space<vmem>>
    %28 = tpu.memref_slice %arg10[%c5_i32] : memref<8x!tpu.dma_semaphore, #tpu.memory_space<semaphore_mem>> -> memref<1x!tpu.dma_semaphore, #tpu.memory_space<semaphore_mem>>
    %29 = tpu.memref_squeeze %28 : memref<1x!tpu.dma_semaphore, #tpu.memory_space<semaphore_mem>> -> memref<!tpu.dma_semaphore, #tpu.memory_space<semaphore_mem>>
    tpu.enqueue_dma source(%26 : memref<1x32xf32, #tpu.memory_space<any>>) target(%27 : memref<1x32xf32, #tpu.memory_space<vmem>>) target_semaphore(%29 : memref<!tpu.dma_semaphore, #tpu.memory_space<semaphore_mem>>)
    %c6 = arith.constant 6 : index
    %30 = memref.load %arg1[%c6] : memref<8xi32, #tpu.memory_space<smem>>
    %c6_i32 = arith.constant 6 : i32
    %c0_i32_18 = arith.constant 0 : i32
    %31 = tpu.memref_slice %arg5[%30, %c0_i32_18] : memref<16x32xf32, #tpu.memory_space<any>> -> memref<1x32xf32, #tpu.memory_space<any>>
    %c6_i32_19 = arith.constant 6 : i32
    %c0_i32_20 = arith.constant 0 : i32
    %32 = tpu.memref_slice %arg9[%c6_i32_19, %c0_i32_20] : memref<8x32xf32, #tpu.memory_space<vmem>> -> memref<1x32xf32, #tpu.memory_space<vmem>>
    %33 = tpu.memref_slice %arg10[%c6_i32] : memref<8x!tpu.dma_semaphore, #tpu.memory_space<semaphore_mem>> -> memref<1x!tpu.dma_semaphore, #tpu.memory_space<semaphore_mem>>
    %34 = tpu.memref_squeeze %33 : memref<1x!tpu.dma_semaphore, #tpu.memory_space<semaphore_mem>> -> memref<!tpu.dma_semaphore, #tpu.memory_space<semaphore_mem>>
    tpu.enqueue_dma source(%31 : memref<1x32xf32, #tpu.memory_space<any>>) target(%32 : memref<1x32xf32, #tpu.memory_space<vmem>>) target_semaphore(%34 : memref<!tpu.dma_semaphore, #tpu.memory_space<semaphore_mem>>)
    %c7 = arith.constant 7 : index
    %35 = memref.load %arg1[%c7] : memref<8xi32, #tpu.memory_space<smem>>
    %c7_i32 = arith.constant 7 : i32
    %c0_i32_21 = arith.constant 0 : i32
    %36 = tpu.memref_slice %arg5[%35, %c0_i32_21] : memref<16x32xf32, #tpu.memory_space<any>> -> memref<1x32xf32, #tpu.memory_space<any>>
    %c7_i32_22 = arith.constant 7 : i32
    %c0_i32_23 = arith.constant 0 : i32
    %37 = tpu.memref_slice %arg9[%c7_i32_22, %c0_i32_23] : memref<8x32xf32, #tpu.memory_space<vmem>> -> memref<1x32xf32, #tpu.memory_space<vmem>>
    %38 = tpu.memref_slice %arg10[%c7_i32] : memref<8x!tpu.dma_semaphore, #tpu.memory_space<semaphore_mem>> -> memref<1x!tpu.dma_semaphore, #tpu.memory_space<semaphore_mem>>
    %39 = tpu.memref_squeeze %38 : memref<1x!tpu.dma_semaphore, #tpu.memory_space<semaphore_mem>> -> memref<!tpu.dma_semaphore, #tpu.memory_space<semaphore_mem>>
    tpu.enqueue_dma source(%36 : memref<1x32xf32, #tpu.memory_space<any>>) target(%37 : memref<1x32xf32, #tpu.memory_space<vmem>>) target_semaphore(%39 : memref<!tpu.dma_semaphore, #tpu.memory_space<semaphore_mem>>)
    %c0_24 = arith.constant 0 : index
    %c0_25 = arith.constant 0 : index
    %40 = vector.load %arg0[%c0_24, %c0_25] : memref<8x16xf32, #tpu.memory_space<vmem>>, vector<8x16xf32>
    %c0_26 = arith.constant 0 : index
    %c0_27 = arith.constant 0 : index
    %41 = vector.load %arg4[%c0_26, %c0_27] : memref<8x32xf32, #tpu.memory_space<vmem>>, vector<8x32xf32>
    %c0_28 = arith.constant 0 : index
    %c0_29 = arith.constant 0 : index
    %42 = vector.load %arg2[%c0_28, %c0_29] : memref<8x1xi32, #tpu.memory_space<vmem>>, vector<8x1xi32>
    %c0_30 = arith.constant 0 : index
    %c0_31 = arith.constant 0 : index
    %43 = vector.load %arg3[%c0_30, %c0_31] : memref<1x8xi32, #tpu.memory_space<vmem>>, vector<1x8xi32>
    %cst = arith.constant dense<0xFF800000> : vector<8xf32>
    %44 = vector.multi_reduction <maximumf>, %40, %cst [1] : vector<8x16xf32> to vector<8xf32>
    %45 = vector.shape_cast %44 : vector<8xf32> to vector<8x1xf32>
    %46 = vector.broadcast %45 : vector<8x1xf32> to vector<8x16xf32>
    %47 = arith.subf %40, %46 : vector<8x16xf32>
    %48 = math.exp %47 : vector<8x16xf32>
    %cst_32 = arith.constant dense<0.000000e+00> : vector<8xf32>
    %49 = vector.multi_reduction <add>, %48, %cst_32 [1] : vector<8x16xf32> to vector<8xf32>
    %50 = vector.shape_cast %49 : vector<8xf32> to vector<8x1xf32>
    %51 = vector.broadcast %50 : vector<8x1xf32> to vector<8x16xf32>
    %52 = arith.divf %48, %51 : vector<8x16xf32>
    %cst_33 = arith.constant dense<0xFF800000> : vector<8xf32>
    %53 = vector.multi_reduction <maximumf>, %52, %cst_33 [1] : vector<8x16xf32> to vector<8xf32>
    %54 = vector.shape_cast %53 : vector<8xf32> to vector<8x1xf32>
    %55 = vector.broadcast %54 : vector<8x1xf32> to vector<8x16xf32>
    %56 = arith.subf %52, %55 : vector<8x16xf32>
    %57 = vector.broadcast %54 : vector<8x1xf32> to vector<8x16xf32>
    %58 = arith.subf %52, %57 : vector<8x16xf32>
    %59 = math.exp %58 : vector<8x16xf32>
    %cst_34 = arith.constant dense<0.000000e+00> : vector<8xf32>
    %60 = vector.multi_reduction <add>, %59, %cst_34 [1] : vector<8x16xf32> to vector<8xf32>
    %61 = vector.shape_cast %60 : vector<8xf32> to vector<8x1xf32>
    %62 = math.log %61 : vector<8x1xf32>
    %63 = vector.broadcast %62 : vector<8x1xf32> to vector<8x16xf32>
    %64 = arith.subf %56, %63 : vector<8x16xf32>
    %65 = tpu.iota {dimensions = array<i32: 1>} : vector<8x16xi32>
    %66 = vector.broadcast %42 : vector<8x1xi32> to vector<8x16xi32>
    %67 = arith.cmpi eq, %65, %66 : vector<8x16xi32>
    %cst_35 = arith.constant 0.000000e+00 : f32
    %68 = vector.broadcast %cst_35 : f32 to vector<8x16xf32>
    %69 = arith.select %67, %64, %68 : vector<8x16xi1>, vector<8x16xf32>
    %cst_36 = arith.constant dense<0.000000e+00> : vector<8xf32>
    %70 = vector.multi_reduction <add>, %69, %cst_36 [1] : vector<8x16xf32> to vector<8xf32>
    %71 = vector.shape_cast %70 : vector<8xf32> to vector<8x1xf32>
    %cst_37 = arith.constant dense<0.000000e+00> : vector<8xf32>
    %72 = vector.multi_reduction <add>, %64, %cst_37 [1] : vector<8x16xf32> to vector<8xf32>
    %73 = vector.shape_cast %72 : vector<8xf32> to vector<8x1xf32>
    %74 = vector.shape_cast %71 : vector<8x1xf32> to vector<1x8x1xf32>
    %cst_38 = arith.constant dense<0.000000e+00> : vector<1xf32>
    %75 = vector.multi_reduction <add>, %74, %cst_38 [1, 2] : vector<1x8x1xf32> to vector<1xf32>
    %76 = vector.shape_cast %75 : vector<1xf32> to vector<1x1x1xf32>
    %77 = vector.extract %76[0, 0, 0] : f32 from vector<1x1x1xf32>
    %78 = vector.broadcast %77 : f32 to vector<1x1xf32>
    %cst_39 = arith.constant 0.899999976 : f32
    %79 = vector.broadcast %cst_39 : f32 to vector<1x1xf32>
    %80 = arith.mulf %79, %78 : vector<1x1xf32>
    %81 = vector.shape_cast %73 : vector<8x1xf32> to vector<1x8x1xf32>
    %cst_40 = arith.constant dense<0.000000e+00> : vector<1xf32>
    %82 = vector.multi_reduction <add>, %81, %cst_40 [1, 2] : vector<1x8x1xf32> to vector<1xf32>
    %83 = vector.shape_cast %82 : vector<1xf32> to vector<1x1x1xf32>
    %84 = vector.extract %83[0, 0, 0] : f32 from vector<1x1x1xf32>
    %85 = vector.broadcast %84 : f32 to vector<1x1xf32>
    %cst_41 = arith.constant 6.250000e-03 : f32
    %86 = vector.broadcast %cst_41 : f32 to vector<1x1xf32>
    %87 = arith.mulf %86, %85 : vector<1x1xf32>
    %88 = arith.addf %80, %87 : vector<1x1xf32>
    %cst_42 = arith.constant 0.000000e+00 : f32
    %89 = vector.broadcast %cst_42 : f32 to vector<1x1xf32>
    %90 = arith.subf %89, %88 : vector<1x1xf32>
    %cst_43 = arith.constant 8.000000e+00 : f32
    %91 = vector.broadcast %cst_43 : f32 to vector<1x1xf32>
    %92 = arith.divf %90, %91 : vector<1x1xf32>
    %c0_44 = arith.constant 0 : index
    %c0_45 = arith.constant 0 : index
    %93 = vector.load %arg6[%c0_44, %c0_45] : memref<1x1xf32, #tpu.memory_space<vmem>>, vector<1x1xf32>
    tpu.vector_store %arg6[%c0_44, %c0_45], %92 {strides = array<i32>} : memref<1x1xf32, #tpu.memory_space<vmem>>, vector<1x1xf32>,
    %94 = arith.mulf %41, %41 : vector<8x32xf32>
    %cst_46 = arith.constant dense<0.000000e+00> : vector<8xf32>
    %95 = vector.multi_reduction <add>, %94, %cst_46 [1] : vector<8x32xf32> to vector<8xf32>
    %96 = vector.shape_cast %95 : vector<8xf32> to vector<8x1xf32>
    %cst_47 = arith.constant dense<0.000000e+00> : vector<8x8xf32>
    %97 = tpu.matmul %41, %41, %cst_47 {dimension_numbers = #tpu.dot_dimension_numbers<[1], [1], [0], [0], [0, 0, 1, 0], [], []>} : vector<8x32xf32>, vector<8x32xf32>, vector<8x8xf32> -> vector<8x8xf32>
    %98 = tpu.transpose %96, [1, 0] : vector<8x1xf32> -> vector<1x8xf32>
    %99 = vector.broadcast %96 : vector<8x1xf32> to vector<8x8xf32>
    %100 = vector.broadcast %98 : vector<1x8xf32> to vector<8x8xf32>
    %101 = arith.addf %99, %100 : vector<8x8xf32>
    %cst_48 = arith.constant 2.000000e+00 : f32
    %102 = vector.broadcast %cst_48 : f32 to vector<8x8xf32>
    %103 = arith.mulf %102, %97 : vector<8x8xf32>
    %104 = arith.subf %101, %103 : vector<8x8xf32>
    %cst_49 = arith.constant 9.99999996E-13 : f32
    %105 = vector.broadcast %cst_49 : f32 to vector<8x8xf32>
    %106 = arith.maximumf %104, %105 : vector<8x8xf32>
    %107 = math.sqrt %106 : vector<8x8xf32>
    %108 = vector.broadcast %42 : vector<8x1xi32> to vector<8x8xi32>
    %109 = vector.broadcast %43 : vector<1x8xi32> to vector<8x8xi32>
    %110 = arith.cmpi eq, %108, %109 : vector<8x8xi32>
    %cst_50 = arith.constant 0xFF800000 : f32
    %111 = vector.broadcast %cst_50 : f32 to vector<8x8xf32>
    %112 = arith.select %110, %107, %111 : vector<8x8xi1>, vector<8x8xf32>
    %cst_51 = arith.constant dense<0xFF800000> : vector<8xf32>
    %113 = vector.multi_reduction <maximumf>, %112, %cst_51 [1] : vector<8x8xf32> to vector<8xf32>
    %114 = vector.shape_cast %113 : vector<8xf32> to vector<8x1xf32>
    %cst_52 = arith.constant 0x7F800000 : f32
    %115 = vector.broadcast %cst_52 : f32 to vector<8x8xf32>
    %116 = arith.select %110, %115, %107 : vector<8x8xi1>, vector<8x8xf32>
    %cst_53 = arith.constant dense<0x7F800000> : vector<8xf32>
    %117 = vector.multi_reduction <minimumf>, %116, %cst_53 [1] : vector<8x8xf32> to vector<8xf32>
    %118 = vector.shape_cast %117 : vector<8xf32> to vector<8x1xf32>
    %119 = arith.subf %114, %118 : vector<8x1xf32>
    %cst_54 = arith.constant 3.000000e-01 : f32
    %120 = vector.broadcast %cst_54 : f32 to vector<8x1xf32>
    %121 = arith.addf %119, %120 : vector<8x1xf32>
    %cst_55 = arith.constant 0.000000e+00 : f32
    %122 = vector.broadcast %cst_55 : f32 to vector<8x1xf32>
    %123 = arith.maximumf %121, %122 : vector<8x1xf32>
    %124 = vector.shape_cast %123 : vector<8x1xf32> to vector<1x8x1xf32>
    %cst_56 = arith.constant dense<0.000000e+00> : vector<1xf32>
    %125 = vector.multi_reduction <add>, %124, %cst_56 [1, 2] : vector<1x8x1xf32> to vector<1xf32>
    %126 = vector.shape_cast %125 : vector<1xf32> to vector<1x1x1xf32>
    %127 = vector.extract %126[0, 0, 0] : f32 from vector<1x1x1xf32>
    %128 = vector.broadcast %127 : f32 to vector<1x1xf32>
    %cst_57 = arith.constant 8.000000e+00 : f32
    %129 = vector.broadcast %cst_57 : f32 to vector<1x1xf32>
    %130 = arith.divf %128, %129 : vector<1x1xf32>
    %c0_58 = arith.constant 0 : index
    %c0_59 = arith.constant 0 : index
    %131 = vector.load %arg7[%c0_58, %c0_59] : memref<1x1xf32, #tpu.memory_space<vmem>>, vector<1x1xf32>
    tpu.vector_store %arg7[%c0_58, %c0_59], %130 {strides = array<i32>} : memref<1x1xf32, #tpu.memory_space<vmem>>, vector<1x1xf32>,
    %c0_i32_60 = arith.constant 0 : i32
    %c0_i32_61 = arith.constant 0 : i32
    %c0_i32_62 = arith.constant 0 : i32
    %132 = tpu.memref_slice %arg5[%c0_i32_61, %c0_i32_62] : memref<16x32xf32, #tpu.memory_space<any>> -> memref<1x32xf32, #tpu.memory_space<any>>
    %c0_i32_63 = arith.constant 0 : i32
    %c0_i32_64 = arith.constant 0 : i32
    %133 = tpu.memref_slice %arg9[%c0_i32_63, %c0_i32_64] : memref<8x32xf32, #tpu.memory_space<vmem>> -> memref<1x32xf32, #tpu.memory_space<vmem>>
    %134 = tpu.memref_slice %arg10[%c0_i32_60] : memref<8x!tpu.dma_semaphore, #tpu.memory_space<semaphore_mem>> -> memref<1x!tpu.dma_semaphore, #tpu.memory_space<semaphore_mem>>
    %135 = tpu.memref_squeeze %134 : memref<1x!tpu.dma_semaphore, #tpu.memory_space<semaphore_mem>> -> memref<!tpu.dma_semaphore, #tpu.memory_space<semaphore_mem>>
    tpu.wait_dma2 semaphore(%135 : memref<!tpu.dma_semaphore, #tpu.memory_space<semaphore_mem>>) src(%132 : memref<1x32xf32, #tpu.memory_space<any>>) dst(%133 : memref<1x32xf32, #tpu.memory_space<vmem>>)
    %c1_i32_65 = arith.constant 1 : i32
    %c0_i32_66 = arith.constant 0 : i32
    %c0_i32_67 = arith.constant 0 : i32
    %136 = tpu.memref_slice %arg5[%c0_i32_66, %c0_i32_67] : memref<16x32xf32, #tpu.memory_space<any>> -> memref<1x32xf32, #tpu.memory_space<any>>
    %c1_i32_68 = arith.constant 1 : i32
    %c0_i32_69 = arith.constant 0 : i32
    %137 = tpu.memref_slice %arg9[%c1_i32_68, %c0_i32_69] : memref<8x32xf32, #tpu.memory_space<vmem>> -> memref<1x32xf32, #tpu.memory_space<vmem>>
    %138 = tpu.memref_slice %arg10[%c1_i32_65] : memref<8x!tpu.dma_semaphore, #tpu.memory_space<semaphore_mem>> -> memref<1x!tpu.dma_semaphore, #tpu.memory_space<semaphore_mem>>
    %139 = tpu.memref_squeeze %138 : memref<1x!tpu.dma_semaphore, #tpu.memory_space<semaphore_mem>> -> memref<!tpu.dma_semaphore, #tpu.memory_space<semaphore_mem>>
    tpu.wait_dma2 semaphore(%139 : memref<!tpu.dma_semaphore, #tpu.memory_space<semaphore_mem>>) src(%136 : memref<1x32xf32, #tpu.memory_space<any>>) dst(%137 : memref<1x32xf32, #tpu.memory_space<vmem>>)
    %c2_i32_70 = arith.constant 2 : i32
    %c0_i32_71 = arith.constant 0 : i32
    %c0_i32_72 = arith.constant 0 : i32
    %140 = tpu.memref_slice %arg5[%c0_i32_71, %c0_i32_72] : memref<16x32xf32, #tpu.memory_space<any>> -> memref<1x32xf32, #tpu.memory_space<any>>
    %c2_i32_73 = arith.constant 2 : i32
    %c0_i32_74 = arith.constant 0 : i32
    %141 = tpu.memref_slice %arg9[%c2_i32_73, %c0_i32_74] : memref<8x32xf32, #tpu.memory_space<vmem>> -> memref<1x32xf32, #tpu.memory_space<vmem>>
    %142 = tpu.memref_slice %arg10[%c2_i32_70] : memref<8x!tpu.dma_semaphore, #tpu.memory_space<semaphore_mem>> -> memref<1x!tpu.dma_semaphore, #tpu.memory_space<semaphore_mem>>
    %143 = tpu.memref_squeeze %142 : memref<1x!tpu.dma_semaphore, #tpu.memory_space<semaphore_mem>> -> memref<!tpu.dma_semaphore, #tpu.memory_space<semaphore_mem>>
    tpu.wait_dma2 semaphore(%143 : memref<!tpu.dma_semaphore, #tpu.memory_space<semaphore_mem>>) src(%140 : memref<1x32xf32, #tpu.memory_space<any>>) dst(%141 : memref<1x32xf32, #tpu.memory_space<vmem>>)
    %c3_i32_75 = arith.constant 3 : i32
    %c0_i32_76 = arith.constant 0 : i32
    %c0_i32_77 = arith.constant 0 : i32
    %144 = tpu.memref_slice %arg5[%c0_i32_76, %c0_i32_77] : memref<16x32xf32, #tpu.memory_space<any>> -> memref<1x32xf32, #tpu.memory_space<any>>
    %c3_i32_78 = arith.constant 3 : i32
    %c0_i32_79 = arith.constant 0 : i32
    %145 = tpu.memref_slice %arg9[%c3_i32_78, %c0_i32_79] : memref<8x32xf32, #tpu.memory_space<vmem>> -> memref<1x32xf32, #tpu.memory_space<vmem>>
    %146 = tpu.memref_slice %arg10[%c3_i32_75] : memref<8x!tpu.dma_semaphore, #tpu.memory_space<semaphore_mem>> -> memref<1x!tpu.dma_semaphore, #tpu.memory_space<semaphore_mem>>
    %147 = tpu.memref_squeeze %146 : memref<1x!tpu.dma_semaphore, #tpu.memory_space<semaphore_mem>> -> memref<!tpu.dma_semaphore, #tpu.memory_space<semaphore_mem>>
    tpu.wait_dma2 semaphore(%147 : memref<!tpu.dma_semaphore, #tpu.memory_space<semaphore_mem>>) src(%144 : memref<1x32xf32, #tpu.memory_space<any>>) dst(%145 : memref<1x32xf32, #tpu.memory_space<vmem>>)
    %c4_i32_80 = arith.constant 4 : i32
    %c0_i32_81 = arith.constant 0 : i32
    %c0_i32_82 = arith.constant 0 : i32
    %148 = tpu.memref_slice %arg5[%c0_i32_81, %c0_i32_82] : memref<16x32xf32, #tpu.memory_space<any>> -> memref<1x32xf32, #tpu.memory_space<any>>
    %c4_i32_83 = arith.constant 4 : i32
    %c0_i32_84 = arith.constant 0 : i32
    %149 = tpu.memref_slice %arg9[%c4_i32_83, %c0_i32_84] : memref<8x32xf32, #tpu.memory_space<vmem>> -> memref<1x32xf32, #tpu.memory_space<vmem>>
    %150 = tpu.memref_slice %arg10[%c4_i32_80] : memref<8x!tpu.dma_semaphore, #tpu.memory_space<semaphore_mem>> -> memref<1x!tpu.dma_semaphore, #tpu.memory_space<semaphore_mem>>
    %151 = tpu.memref_squeeze %150 : memref<1x!tpu.dma_semaphore, #tpu.memory_space<semaphore_mem>> -> memref<!tpu.dma_semaphore, #tpu.memory_space<semaphore_mem>>
    tpu.wait_dma2 semaphore(%151 : memref<!tpu.dma_semaphore, #tpu.memory_space<semaphore_mem>>) src(%148 : memref<1x32xf32, #tpu.memory_space<any>>) dst(%149 : memref<1x32xf32, #tpu.memory_space<vmem>>)
    %c5_i32_85 = arith.constant 5 : i32
    %c0_i32_86 = arith.constant 0 : i32
    %c0_i32_87 = arith.constant 0 : i32
    %152 = tpu.memref_slice %arg5[%c0_i32_86, %c0_i32_87] : memref<16x32xf32, #tpu.memory_space<any>> -> memref<1x32xf32, #tpu.memory_space<any>>
    %c5_i32_88 = arith.constant 5 : i32
    %c0_i32_89 = arith.constant 0 : i32
    %153 = tpu.memref_slice %arg9[%c5_i32_88, %c0_i32_89] : memref<8x32xf32, #tpu.memory_space<vmem>> -> memref<1x32xf32, #tpu.memory_space<vmem>>
    %154 = tpu.memref_slice %arg10[%c5_i32_85] : memref<8x!tpu.dma_semaphore, #tpu.memory_space<semaphore_mem>> -> memref<1x!tpu.dma_semaphore, #tpu.memory_space<semaphore_mem>>
    %155 = tpu.memref_squeeze %154 : memref<1x!tpu.dma_semaphore, #tpu.memory_space<semaphore_mem>> -> memref<!tpu.dma_semaphore, #tpu.memory_space<semaphore_mem>>
    tpu.wait_dma2 semaphore(%155 : memref<!tpu.dma_semaphore, #tpu.memory_space<semaphore_mem>>) src(%152 : memref<1x32xf32, #tpu.memory_space<any>>) dst(%153 : memref<1x32xf32, #tpu.memory_space<vmem>>)
    %c6_i32_90 = arith.constant 6 : i32
    %c0_i32_91 = arith.constant 0 : i32
    %c0_i32_92 = arith.constant 0 : i32
    %156 = tpu.memref_slice %arg5[%c0_i32_91, %c0_i32_92] : memref<16x32xf32, #tpu.memory_space<any>> -> memref<1x32xf32, #tpu.memory_space<any>>
    %c6_i32_93 = arith.constant 6 : i32
    %c0_i32_94 = arith.constant 0 : i32
    %157 = tpu.memref_slice %arg9[%c6_i32_93, %c0_i32_94] : memref<8x32xf32, #tpu.memory_space<vmem>> -> memref<1x32xf32, #tpu.memory_space<vmem>>
    %158 = tpu.memref_slice %arg10[%c6_i32_90] : memref<8x!tpu.dma_semaphore, #tpu.memory_space<semaphore_mem>> -> memref<1x!tpu.dma_semaphore, #tpu.memory_space<semaphore_mem>>
    %159 = tpu.memref_squeeze %158 : memref<1x!tpu.dma_semaphore, #tpu.memory_space<semaphore_mem>> -> memref<!tpu.dma_semaphore, #tpu.memory_space<semaphore_mem>>
    tpu.wait_dma2 semaphore(%159 : memref<!tpu.dma_semaphore, #tpu.memory_space<semaphore_mem>>) src(%156 : memref<1x32xf32, #tpu.memory_space<any>>) dst(%157 : memref<1x32xf32, #tpu.memory_space<vmem>>)
    %c7_i32_95 = arith.constant 7 : i32
    %c0_i32_96 = arith.constant 0 : i32
    %c0_i32_97 = arith.constant 0 : i32
    %160 = tpu.memref_slice %arg5[%c0_i32_96, %c0_i32_97] : memref<16x32xf32, #tpu.memory_space<any>> -> memref<1x32xf32, #tpu.memory_space<any>>
    %c7_i32_98 = arith.constant 7 : i32
    %c0_i32_99 = arith.constant 0 : i32
    %161 = tpu.memref_slice %arg9[%c7_i32_98, %c0_i32_99] : memref<8x32xf32, #tpu.memory_space<vmem>> -> memref<1x32xf32, #tpu.memory_space<vmem>>
    %162 = tpu.memref_slice %arg10[%c7_i32_95] : memref<8x!tpu.dma_semaphore, #tpu.memory_space<semaphore_mem>> -> memref<1x!tpu.dma_semaphore, #tpu.memory_space<semaphore_mem>>
    %163 = tpu.memref_squeeze %162 : memref<1x!tpu.dma_semaphore, #tpu.memory_space<semaphore_mem>> -> memref<!tpu.dma_semaphore, #tpu.memory_space<semaphore_mem>>
    tpu.wait_dma2 semaphore(%163 : memref<!tpu.dma_semaphore, #tpu.memory_space<semaphore_mem>>) src(%160 : memref<1x32xf32, #tpu.memory_space<any>>) dst(%161 : memref<1x32xf32, #tpu.memory_space<vmem>>)
    %c0_100 = arith.constant 0 : index
    %c0_101 = arith.constant 0 : index
    %164 = vector.load %arg9[%c0_100, %c0_101] : memref<8x32xf32, #tpu.memory_space<vmem>>, vector<8x32xf32>
    %165 = arith.subf %41, %164 : vector<8x32xf32>
    %166 = arith.mulf %165, %165 : vector<8x32xf32>
    %cst_102 = arith.constant dense<0.000000e+00> : vector<8xf32>
    %167 = vector.multi_reduction <add>, %166, %cst_102 [1] : vector<8x32xf32> to vector<8xf32>
    %168 = vector.shape_cast %167 : vector<8xf32> to vector<8x1xf32>
    %cst_103 = arith.constant 9.99999996E-13 : f32
    %cst_104 = arith.constant 9.99999995E+11 : f32
    %169 = vector.broadcast %cst_103 : f32 to vector<8x1xf32>
    %170 = arith.maximumf %169, %168 : vector<8x1xf32>
    %171 = vector.broadcast %cst_104 : f32 to vector<8x1xf32>
    %172 = arith.minimumf %171, %170 : vector<8x1xf32>
    %173 = vector.shape_cast %172 : vector<8x1xf32> to vector<1x8x1xf32>
    %cst_105 = arith.constant dense<0.000000e+00> : vector<1xf32>
    %174 = vector.multi_reduction <add>, %173, %cst_105 [1, 2] : vector<1x8x1xf32> to vector<1xf32>
    %175 = vector.shape_cast %174 : vector<1xf32> to vector<1x1x1xf32>
    %176 = vector.extract %175[0, 0, 0] : f32 from vector<1x1x1xf32>
    %177 = vector.broadcast %176 : f32 to vector<1x1xf32>
    %cst_106 = arith.constant 8.000000e+00 : f32
    %178 = vector.broadcast %cst_106 : f32 to vector<1x1xf32>
    %179 = arith.divf %177, %178 : vector<1x1xf32>
    %cst_107 = arith.constant 1.500000e-11 : f32
    %180 = vector.broadcast %cst_107 : f32 to vector<1x1xf32>
    %181 = arith.addf %179, %180 : vector<1x1xf32>
    %cst_108 = arith.constant 5.000000e-04 : f32
    %182 = vector.broadcast %cst_108 : f32 to vector<1x1xf32>
    %183 = arith.mulf %181, %182 : vector<1x1xf32>
    %c0_109 = arith.constant 0 : index
    %c0_110 = arith.constant 0 : index
    %184 = vector.load %arg8[%c0_109, %c0_110] : memref<1x1xf32, #tpu.memory_space<vmem>>, vector<1x1xf32>
    tpu.vector_store %arg8[%c0_109, %c0_110], %183 {strides = array<i32>} : memref<1x1xf32, #tpu.memory_space<vmem>>, vector<1x1xf32>,
    return
  }
}

</mosaic_0001>

<llo_original>
// kernel: tpu_custom_call.1
$region0: #{tpu_custom_call.1}
  #allocation0 [shape = 'u32[]', space=smem, size = 0x4, offset = 0x4, fixed_abs, tag = 'smem constant byte address 0x4 - core index']
  #allocation1 [shape = 'u32[144,128]{1,0:T(1,128)}', space=vmem, size = 0x12000, scoped, tag = 'internal scratch']
  #allocation2 [shape = 'f32[8,32]{1,0:T(8,128)}', space=vmem, size = 0x1000, scoped, tag = 'scratch operand']
  #allocation3 [shape = 's32[8]{0}', space=sflag, size = 0x20, scoped, tag = 'scratch operand']
  #allocation15 [shape = 's32[]', space=sflag, size = 0x4, offset = 0, fixed_abs, tag = 'sflag constant byte address 0x0 - dummy sync flag']
  #allocation16 [shape = 's32[]', space=sflag, size = 0x4, offset = 0, fixed_abs, tag = 'sflag constant byte address 0x0 - dummy sync flag']
  #allocation17 [shape = 's32[]', space=sflag, size = 0x4, offset = 0, fixed_abs, tag = 'sflag constant byte address 0x0 - dummy sync flag']
  #allocation18 [shape = 's32[]', space=sflag, size = 0x4, offset = 0, fixed_abs, tag = 'sflag constant byte address 0x0 - dummy sync flag']
  #allocation19 [shape = 's32[]', space=sflag, size = 0x4, offset = 0, fixed_abs, tag = 'sflag constant byte address 0x0 - dummy sync flag']
  #allocation20 [shape = 's32[]', space=sflag, size = 0x4, offset = 0, fixed_abs, tag = 'sflag constant byte address 0x0 - dummy sync flag']
  #allocation21 [shape = 's32[]', space=sflag, size = 0x4, offset = 0, fixed_abs, tag = 'sflag constant byte address 0x0 - dummy sync flag']
  #allocation22 [shape = 's32[]', space=sflag, size = 0x4, offset = 0, fixed_abs, tag = 'sflag constant byte address 0x0 - dummy sync flag']
  %s0 = inlined_call_operand.hbm [shape: f32[8,16], index: 0, kind: input, shape index: {}]
  %s1 = inlined_call_operand.vmem [shape: s32[8], index: 1, kind: input, shape index: {}]
  %s2 = inlined_call_operand.vmem [shape: s32[8,1], index: 2, kind: input, shape index: {}]
  %s3 = inlined_call_operand.vmem [shape: s32[1,8], index: 3, kind: input, shape index: {}]
  %s4 = inlined_call_operand.hbm [shape: f32[8,32], index: 4, kind: input, shape index: {}]
  %s5 = inlined_call_operand.vmem [shape: f32[16,32], index: 5, kind: input, shape index: {}]
  %s6 = inlined_call_operand.hbm [shape: f32[1,1], index: 6, kind: output, shape index: {0}]
  %s7 = inlined_call_operand.hbm [shape: f32[1,1], index: 7, kind: output, shape index: {1}]
  %s8 = inlined_call_operand.hbm [shape: f32[1,1], index: 8, kind: output, shape index: {2}]
  %9 = xla_tuple %s6, %s7, %s8
  %s10 = sld [smem:[#allocation0]]
  $region298: #{tpu_custom_call.1} parent=0
    _
  %s12 = ssub.s32 1, %s10
  %s13 = scalar_select 0, %s12, %s10
  $region1: #{tpu_custom_call.1} parent=0
    #allocation4 [shape = 'u8[4096]{0}', space=vmem, size = 0x1000, scoped, tag = 'input window, operand 0, single buffered']
    #allocation5 [shape = 's32[1]{0}', space=sflag, size = 0x4, scoped, tag = 'scoped memory for tpu_custom_call.1']
    #allocation6 [shape = 's32[1]{0}', space=sflag, size = 0x4, scoped, tag = 'scoped memory for tpu_custom_call.1']
    #allocation7 [shape = 's32[1]{0}', space=sflag, size = 0x4, scoped, tag = 'scoped memory for tpu_custom_call.1']
    #allocation8 [shape = 'u8[512]{0}', space=smem, size = 0x200, scoped, tag = 'input window, operand 1, single buffered']
    #allocation9 [shape = 'u8[4096]{0}', space=vmem, size = 0x1000, scoped, tag = 'input window, operand 4, single buffered']
    #allocation10 [shape = 's32[1]{0}', space=sflag, size = 0x4, scoped, tag = 'scoped memory for tpu_custom_call.1']
    #allocation11 [shape = 'u8[512]{0}', space=vmem, size = 0x400, scoped, tag = 'output window, operand 0, single buffered']
    #allocation12 [shape = 'u8[512]{0}', space=vmem, size = 0x400, scoped, tag = 'output window, operand 1, single buffered']
    #allocation13 [shape = 's32[1]{0}', space=sflag, size = 0x4, scoped, tag = 'scoped memory for tpu_custom_call.1']
    #allocation14 [shape = 'u8[512]{0}', space=vmem, size = 0x400, scoped, tag = 'output window, operand 2, single buffered']
    %14 = vsyncpa [#allocation5], 0
    %15 = vsyncpa [#allocation7], 0
    %16 = vsyncpa [#allocation10], 0
    %17 = vsyncpa [#allocation6], 0
    %18 = vsyncpa [#allocation13], 0
    // Predicated region
    $region2: #{tpu_custom_call.1} parent=1 // pred_check
      _
    $region3: #{tpu_custom_call.1} parent=1 // pred_check_branch
      %20 = sbr.rel (0) target = $region5
    $region4: #{tpu_custom_call.1} parent=1 // pred_region
      %s22 = ssub.s32 128, 128
      %23 = vsyncadd [#allocation5], %s22
      %s25 = sshll.u32 [#allocation4], 4
      %s26 = int_to_ptr.vmem [resolvable:$true] %s25
      %28 = dma.hbm_to_vmem [thread:$0]  %s0, 128, %s26, [#allocation5]
    $region5: #{tpu_custom_call.1} parent=1 // pred_fallthru
      _
    // Predicated region
    $region6: #{tpu_custom_call.1} parent=1 // pred_check
      _
    $region7: #{tpu_custom_call.1} parent=1 // pred_check_branch
      %30 = sbr.rel (0) target = $region9
    $region8: #{tpu_custom_call.1} parent=1 // pred_region
      %s32 = ssub.s32 16, 16
      %33 = vsyncadd [#allocation7], %s32
      %s35 = sshll.u32 %s1, 4
      %s36 = int_to_ptr.vmem [resolvable:$true] %s35
      %38 = dma.vmem_to_smem %s36, 16, [#allocation8], [#allocation7]
    $region9: #{tpu_custom_call.1} parent=1 // pred_fallthru
      _
    // Predicated region
    $region10: #{tpu_custom_call.1} parent=1 // pred_check
      _
    $region11: #{tpu_custom_call.1} parent=1 // pred_check_branch
      %40 = sbr.rel (0) target = $region13
    $region12: #{tpu_custom_call.1} parent=1 // pred_region
      _
    $region13: #{tpu_custom_call.1} parent=1 // pred_fallthru
      _
    // Predicated region
    $region14: #{tpu_custom_call.1} parent=1 // pred_check
      _
    $region15: #{tpu_custom_call.1} parent=1 // pred_check_branch
      %42 = sbr.rel (0) target = $region17
    $region16: #{tpu_custom_call.1} parent=1 // pred_region
      _
    $region17: #{tpu_custom_call.1} parent=1 // pred_fallthru
      _
    // Predicated region
    $region18: #{tpu_custom_call.1} parent=1 // pred_check
      _
    $region19: #{tpu_custom_call.1} parent=1 // pred_check_branch
      %44 = sbr.rel (0) target = $region21
    $region20: #{tpu_custom_call.1} parent=1 // pred_region
      %s46 = ssub.s32 128, 128
      %47 = vsyncadd [#allocation10], %s46
      %s49 = sshll.u32 [#allocation9], 4
      %s50 = int_to_ptr.vmem [resolvable:$true] %s49
      %52 = dma.hbm_to_vmem [thread:$0]  %s4, 128, %s50, [#allocation10]
    $region21: #{tpu_custom_call.1} parent=1 // pred_fallthru
      _
    // Predicated region
    $region22: #{tpu_custom_call.1} parent=1 // pred_check
      _
    $region23: #{tpu_custom_call.1} parent=1 // pred_check_branch
      %54 = sbr.rel (0) target = $region25
    $region24: #{tpu_custom_call.1} parent=1 // pred_region
      %55 = dma.done [#allocation5], 128
    $region25: #{tpu_custom_call.1} parent=1 // pred_fallthru
      _
    // Predicated region
    $region26: #{tpu_custom_call.1} parent=1 // pred_check
      _
    $region27: #{tpu_custom_call.1} parent=1 // pred_check_branch
      %57 = sbr.rel (0) target = $region29
    $region28: #{tpu_custom_call.1} parent=1 // pred_region
      %58 = dma.done [#allocation7], 16
    $region29: #{tpu_custom_call.1} parent=1 // pred_fallthru
      _
    // Predicated region
    $region30: #{tpu_custom_call.1} parent=1 // pred_check
      _
    $region31: #{tpu_custom_call.1} parent=1 // pred_check_branch
      %60 = sbr.rel (0) target = $region33
    $region32: #{tpu_custom_call.1} parent=1 // pred_region
      %61 = dma.done [#allocation10], 128
    $region33: #{tpu_custom_call.1} parent=1 // pred_fallthru
      _
    %62 = sfence
    %s63 = sld [smem:[#allocation8]]
    %s64 = scalar_lea.vmem %s5, %s63
    %p66 = scmp.lt.u32.totalorder 1, 8
    %p67 = pneg %p66
    // Predicated region
    $region34: #{tpu_custom_call.1} parent=1 // pred_check
      _
    $region35: #{tpu_custom_call.1} parent=1 // pred_check_branch
      %69 = sbr.rel (%p66) target = $region37
    $region36: #{tpu_custom_call.1} parent=1 // pred_region
      %s85 = sand.u32 1, 7
      %p86 = scmp.eq.s32.totalorder %s85, 0
      %p87 = pneg %p86
      // Predicated region
      $region49: #{tpu_custom_call.1} parent=36 // pred_check
        _
      $region50: #{tpu_custom_call.1} parent=36 // pred_check_branch
        %89 = sbr.rel (%p86) target = $region52
      $region51: #{tpu_custom_call.1} parent=36 // pred_region
        %s90 = sand.u32 1, 7
        %s91 = ssub.s32 1, %s90
        %s92 = scalar_lea.vmem %s64, %s91
        %s93 = ssub.s32 1, %s90
        %s94 = scalar_lea.vmem [#allocation2], %s93
        %s95 = sshll.u32 1, %s90
        %s96 = ssub.s32 %s95, 1
        loop: start=0, step=1, limit=1
        $region53: #{tpu_custom_call.1} parent=51 // loop_pre_header
          _
        $region54: #{tpu_custom_call.1} parent=51 // loop_header
          %s98 = sphi 0, %s102
          %p99 = scmp.ge.s32.totalorder %s98, 1
          %s103 = sphi %s92, %s92
          %s104 = sphi %s94, %s94
        $region55: #{tpu_custom_call.1} parent=51 // loop_header_branch
          %101 = sbr.rel (%p99) target = $region59
        $region56: #{tpu_custom_call.1} parent=51 // loop_body
          %v105 = vld [vmem:[%s103] sm:%s96]
          %106 = vst [vmem:[%s104] sm:%s96] %v105
        $region57: #{tpu_custom_call.1} parent=51 // loop_footer
          %s102 = sadd.s32 1, %s98
        $region58: #{tpu_custom_call.1} parent=51 // loop_footer_branch
          %97 = sbr.rel target = $region54
        $region59: #{tpu_custom_call.1} parent=51 // loop_exit
          _
      $region52: #{tpu_custom_call.1} parent=36 // pred_fallthru
        _
    $region37: #{tpu_custom_call.1} parent=1 // pred_fallthru
      _
    // Predicated region
    $region38: #{tpu_custom_call.1} parent=1 // pred_check
      %p70 = pneg %p66
    $region39: #{tpu_custom_call.1} parent=1 // pred_check_branch
      %72 = sbr.rel (%p70) target = $region41
    $region40: #{tpu_custom_call.1} parent=1 // pred_region
      %s73 = sshll.u32 1, 1
      %s74 = ssub.s32 %s73, 1
      loop: start=0, step=1, limit=1
      $region42: #{tpu_custom_call.1} parent=40 // loop_pre_header
        _
      $region43: #{tpu_custom_call.1} parent=40 // loop_header
        %s76 = sphi 0, %s80
        %p77 = scmp.ge.s32.totalorder %s76, 1
        %s81 = sphi %s64, %s64
        %s82 = sphi [#allocation2], [#allocation2]
      $region44: #{tpu_custom_call.1} parent=40 // loop_header_branch
        %79 = sbr.rel (%p77) target = $region48
      $region45: #{tpu_custom_call.1} parent=40 // loop_body
        %v83 = vld [vmem:[%s81] sm:%s74]
        %84 = vst [vmem:[%s82] sm:%s74] %v83
      $region46: #{tpu_custom_call.1} parent=40 // loop_footer
        %s80 = sadd.s32 1, %s76
      $region47: #{tpu_custom_call.1} parent=40 // loop_footer_branch
        %75 = sbr.rel target = $region43
      $region48: #{tpu_custom_call.1} parent=40 // loop_exit
        _
    $region41: #{tpu_custom_call.1} parent=1 // pred_fallthru
      _
    // Predicated region
    $region60: #{tpu_custom_call.1} parent=1 // pred_check
      _
    $region61: #{tpu_custom_call.1} parent=1 // pred_check_branch
      %109 = sbr.rel (0) target = $region63
    $region62: #{tpu_custom_call.1} parent=1 // pred_region
      %110 = vsyncadd [#allocation3], 16
    $region63: #{tpu_custom_call.1} parent=1 // pred_fallthru
      _
    %s111 = sld [smem:[#allocation8 + $0x1]]
    %s112 = scalar_lea.vmem %s5, %s111
    %s113 = scalar_lea.vmem [#allocation2], 1
    %s114 = scalar_lea.sflag [#allocation3], 1
    %p116 = scmp.lt.u32.totalorder 1, 8
    %p117 = pneg %p116
    // Predicated region
    $region64: #{tpu_custom_call.1} parent=1 // pred_check
      _
    $region65: #{tpu_custom_call.1} parent=1 // pred_check_branch
      %119 = sbr.rel (%p116) target = $region67
    $region66: #{tpu_custom_call.1} parent=1 // pred_region
      %s135 = sand.u32 1, 7
      %p136 = scmp.eq.s32.totalorder %s135, 0
      %p137 = pneg %p136
      // Predicated region
      $region79: #{tpu_custom_call.1} parent=66 // pred_check
        _
      $region80: #{tpu_custom_call.1} parent=66 // pred_check_branch
        %139 = sbr.rel (%p136) target = $region82
      $region81: #{tpu_custom_call.1} parent=66 // pred_region
        %s140 = sand.u32 1, 7
        %s141 = ssub.s32 1, %s140
        %s142 = scalar_lea.vmem %s112, %s141
        %s143 = ssub.s32 1, %s140
        %s144 = scalar_lea.vmem %s113, %s143 [#allocation2]
        %s145 = sshll.u32 1, %s140
        %s146 = ssub.s32 %s145, 1
        loop: start=0, step=1, limit=1
        $region83: #{tpu_custom_call.1} parent=81 // loop_pre_header
          _
        $region84: #{tpu_custom_call.1} parent=81 // loop_header
          %s148 = sphi 0, %s152
          %p149 = scmp.ge.s32.totalorder %s148, 1
          %s153 = sphi %s142, %s142
          %s154 = sphi %s144, %s144
        $region85: #{tpu_custom_call.1} parent=81 // loop_header_branch
          %151 = sbr.rel (%p149) target = $region89
        $region86: #{tpu_custom_call.1} parent=81 // loop_body
          %v155 = vld [vmem:[%s153] sm:%s146]
          %156 = vst [vmem:[%s154] sm:%s146] %v155
        $region87: #{tpu_custom_call.1} parent=81 // loop_footer
          %s152 = sadd.s32 1, %s148
        $region88: #{tpu_custom_call.1} parent=81 // loop_footer_branch
          %147 = sbr.rel target = $region84
        $region89: #{tpu_custom_call.1} parent=81 // loop_exit
          _
      $region82: #{tpu_custom_call.1} parent=66 // pred_fallthru
        _
    $region67: #{tpu_custom_call.1} parent=1 // pred_fallthru
      _
    // Predicated region
    $region68: #{tpu_custom_call.1} parent=1 // pred_check
      %p120 = pneg %p116
    $region69: #{tpu_custom_call.1} parent=1 // pred_check_branch
      %122 = sbr.rel (%p120) target = $region71
    $region70: #{tpu_custom_call.1} parent=1 // pred_region
      %s123 = sshll.u32 1, 1
      %s124 = ssub.s32 %s123, 1
      loop: start=0, step=1, limit=1
      $region72: #{tpu_custom_call.1} parent=70 // loop_pre_header
        _
      $region73: #{tpu_custom_call.1} parent=70 // loop_header
        %s126 = sphi 0, %s130
        %p127 = scmp.ge.s32.totalorder %s126, 1
        %s131 = sphi %s112, %s112
        %s132 = sphi %s113, %s113
      $region74: #{tpu_custom_call.1} parent=70 // loop_header_branch
        %129 = sbr.rel (%p127) target = $region78
      $region75: #{tpu_custom_call.1} parent=70 // loop_body
        %v133 = vld [vmem:[%s131] sm:%s124]
        %134 = vst [vmem:[%s132] sm:%s124] %v133
      $region76: #{tpu_custom_call.1} parent=70 // loop_footer
        %s130 = sadd.s32 1, %s126
      $region77: #{tpu_custom_call.1} parent=70 // loop_footer_branch
        %125 = sbr.rel target = $region73
      $region78: #{tpu_custom_call.1} parent=70 // loop_exit
        _
    $region71: #{tpu_custom_call.1} parent=1 // pred_fallthru
      _
    // Predicated region
    $region90: #{tpu_custom_call.1} parent=1 // pred_check
      _
    $region91: #{tpu_custom_call.1} parent=1 // pred_check_branch
      %159 = sbr.rel (0) target = $region93
    $region92: #{tpu_custom_call.1} parent=1 // pred_region
      %160 = vsyncadd %s114, 16
    $region93: #{tpu_custom_call.1} parent=1 // pred_fallthru
      _
    %s161 = sld [smem:[#allocation8 + $0x2]]
    %s162 = scalar_lea.vmem %s5, %s161
    %s163 = scalar_lea.vmem [#allocation2], 2
    %s164 = scalar_lea.sflag [#allocation3], 2
    %p166 = scmp.lt.u32.totalorder 1, 8
    %p167 = pneg %p166
    // Predicated region
    $region94: #{tpu_custom_call.1} parent=1 // pred_check
      _
    $region95: #{tpu_custom_call.1} parent=1 // pred_check_branch
      %169 = sbr.rel (%p166) target = $region97
    $region96: #{tpu_custom_call.1} parent=1 // pred_region
      %s185 = sand.u32 1, 7
      %p186 = scmp.eq.s32.totalorder %s185, 0
      %p187 = pneg %p186
      // Predicated region
      $region109: #{tpu_custom_call.1} parent=96 // pred_check
        _
      $region110: #{tpu_custom_call.1} parent=96 // pred_check_branch
        %189 = sbr.rel (%p186) target = $region112
      $region111: #{tpu_custom_call.1} parent=96 // pred_region
        %s190 = sand.u32 1, 7
        %s191 = ssub.s32 1, %s190
        %s192 = scalar_lea.vmem %s162, %s191
        %s193 = ssub.s32 1, %s190
        %s194 = scalar_lea.vmem %s163, %s193 [#allocation2]
        %s195 = sshll.u32 1, %s190
        %s196 = ssub.s32 %s195, 1
        loop: start=0, step=1, limit=1
        $region113: #{tpu_custom_call.1} parent=111 // loop_pre_header
          _
        $region114: #{tpu_custom_call.1} parent=111 // loop_header
          %s198 = sphi 0, %s202
          %p199 = scmp.ge.s32.totalorder %s198, 1
          %s203 = sphi %s192, %s192
          %s204 = sphi %s194, %s194
        $region115: #{tpu_custom_call.1} parent=111 // loop_header_branch
          %201 = sbr.rel (%p199) target = $region119
        $region116: #{tpu_custom_call.1} parent=111 // loop_body
          %v205 = vld [vmem:[%s203] sm:%s196]
          %206 = vst [vmem:[%s204] sm:%s196] %v205
        $region117: #{tpu_custom_call.1} parent=111 // loop_footer
          %s202 = sadd.s32 1, %s198
        $region118: #{tpu_custom_call.1} parent=111 // loop_footer_branch
          %197 = sbr.rel target = $region114
        $region119: #{tpu_custom_call.1} parent=111 // loop_exit
          _
      $region112: #{tpu_custom_call.1} parent=96 // pred_fallthru
        _
    $region97: #{tpu_custom_call.1} parent=1 // pred_fallthru
      _
    // Predicated region
    $region98: #{tpu_custom_call.1} parent=1 // pred_check
      %p170 = pneg %p166
    $region99: #{tpu_custom_call.1} parent=1 // pred_check_branch
      %172 = sbr.rel (%p170) target = $region101
    $region100: #{tpu_custom_call.1} parent=1 // pred_region
      %s173 = sshll.u32 1, 1
      %s174 = ssub.s32 %s173, 1
      loop: start=0, step=1, limit=1
      $region102: #{tpu_custom_call.1} parent=100 // loop_pre_header
        _
      $region103: #{tpu_custom_call.1} parent=100 // loop_header
        %s176 = sphi 0, %s180
        %p177 = scmp.ge.s32.totalorder %s176, 1
        %s181 = sphi %s162, %s162
        %s182 = sphi %s163, %s163
      $region104: #{tpu_custom_call.1} parent=100 // loop_header_branch
        %179 = sbr.rel (%p177) target = $region108
      $region105: #{tpu_custom_call.1} parent=100 // loop_body
        %v183 = vld [vmem:[%s181] sm:%s174]
        %184 = vst [vmem:[%s182] sm:%s174] %v183
      $region106: #{tpu_custom_call.1} parent=100 // loop_footer
        %s180 = sadd.s32 1, %s176
      $region107: #{tpu_custom_call.1} parent=100 // loop_footer_branch
        %175 = sbr.rel target = $region103
      $region108: #{tpu_custom_call.1} parent=100 // loop_exit
        _
    $region101: #{tpu_custom_call.1} parent=1 // pred_fallthru
      _
    // Predicated region
    $region120: #{tpu_custom_call.1} parent=1 // pred_check
      _
    $region121: #{tpu_custom_call.1} parent=1 // pred_check_branch
      %209 = sbr.rel (0) target = $region123
    $region122: #{tpu_custom_call.1} parent=1 // pred_region
      %210 = vsyncadd %s164, 16
    $region123: #{tpu_custom_call.1} parent=1 // pred_fallthru
      _
    %s211 = sld [smem:[#allocation8 + $0x3]]
    %s212 = scalar_lea.vmem %s5, %s211
    %s213 = scalar_lea.vmem [#allocation2], 3
    %s214 = scalar_lea.sflag [#allocation3], 3
    %p216 = scmp.lt.u32.totalorder 1, 8
    %p217 = pneg %p216
    // Predicated region
    $region124: #{tpu_custom_call.1} parent=1 // pred_check
      _
    $region125: #{tpu_custom_call.1} parent=1 // pred_check_branch
      %219 = sbr.rel (%p216) target = $region127
    $region126: #{tpu_custom_call.1} parent=1 // pred_region
      %s235 = sand.u32 1, 7
      %p236 = scmp.eq.s32.totalorder %s235, 0
      %p237 = pneg %p236
      // Predicated region
      $region139: #{tpu_custom_call.1} parent=126 // pred_check
        _
      $region140: #{tpu_custom_call.1} parent=126 // pred_check_branch
        %239 = sbr.rel (%p236) target = $region142
      $region141: #{tpu_custom_call.1} parent=126 // pred_region
        %s240 = sand.u32 1, 7
        %s241 = ssub.s32 1, %s240
        %s242 = scalar_lea.vmem %s212, %s241
        %s243 = ssub.s32 1, %s240
        %s244 = scalar_lea.vmem %s213, %s243 [#allocation2]
        %s245 = sshll.u32 1, %s240
        %s246 = ssub.s32 %s245, 1
        loop: start=0, step=1, limit=1
        $region143: #{tpu_custom_call.1} parent=141 // loop_pre_header
          _
        $region144: #{tpu_custom_call.1} parent=141 // loop_header
          %s248 = sphi 0, %s252
          %p249 = scmp.ge.s32.totalorder %s248, 1
          %s253 = sphi %s242, %s242
          %s254 = sphi %s244, %s244
        $region145: #{tpu_custom_call.1} parent=141 // loop_header_branch
          %251 = sbr.rel (%p249) target = $region149
        $region146: #{tpu_custom_call.1} parent=141 // loop_body
          %v255 = vld [vmem:[%s253] sm:%s246]
          %256 = vst [vmem:[%s254] sm:%s246] %v255
        $region147: #{tpu_custom_call.1} parent=141 // loop_footer
          %s252 = sadd.s32 1, %s248
        $region148: #{tpu_custom_call.1} parent=141 // loop_footer_branch
          %247 = sbr.rel target = $region144
        $region149: #{tpu_custom_call.1} parent=141 // loop_exit
          _
      $region142: #{tpu_custom_call.1} parent=126 // pred_fallthru
        _
    $region127: #{tpu_custom_call.1} parent=1 // pred_fallthru
      _
    // Predicated region
    $region128: #{tpu_custom_call.1} parent=1 // pred_check
      %p220 = pneg %p216
    $region129: #{tpu_custom_call.1} parent=1 // pred_check_branch
      %222 = sbr.rel (%p220) target = $region131
    $region130: #{tpu_custom_call.1} parent=1 // pred_region
      %s223 = sshll.u32 1, 1
      %s224 = ssub.s32 %s223, 1
      loop: start=0, step=1, limit=1
      $region132: #{tpu_custom_call.1} parent=130 // loop_pre_header
        _
      $region133: #{tpu_custom_call.1} parent=130 // loop_header
        %s226 = sphi 0, %s230
        %p227 = scmp.ge.s32.totalorder %s226, 1
        %s231 = sphi %s212, %s212
        %s232 = sphi %s213, %s213
      $region134: #{tpu_custom_call.1} parent=130 // loop_header_branch
        %229 = sbr.rel (%p227) target = $region138
      $region135: #{tpu_custom_call.1} parent=130 // loop_body
        %v233 = vld [vmem:[%s231] sm:%s224]
        %234 = vst [vmem:[%s232] sm:%s224] %v233
      $region136: #{tpu_custom_call.1} parent=130 // loop_footer
        %s230 = sadd.s32 1, %s226
      $region137: #{tpu_custom_call.1} parent=130 // loop_footer_branch
        %225 = sbr.rel target = $region133
      $region138: #{tpu_custom_call.1} parent=130 // loop_exit
        _
    $region131: #{tpu_custom_call.1} parent=1 // pred_fallthru
      _
    // Predicated region
    $region150: #{tpu_custom_call.1} parent=1 // pred_check
      _
    $region151: #{tpu_custom_call.1} parent=1 // pred_check_branch
      %259 = sbr.rel (0) target = $region153
    $region152: #{tpu_custom_call.1} parent=1 // pred_region
      %260 = vsyncadd %s214, 16
    $region153: #{tpu_custom_call.1} parent=1 // pred_fallthru
      _
    %s261 = sld [smem:[#allocation8 + $0x4]]
    %s262 = scalar_lea.vmem %s5, %s261
    %s263 = scalar_lea.vmem [#allocation2], 4
    %s264 = scalar_lea.sflag [#allocation3], 4
    %p266 = scmp.lt.u32.totalorder 1, 8
    %p267 = pneg %p266
    // Predicated region
    $region154: #{tpu_custom_call.1} parent=1 // pred_check
      _
    $region155: #{tpu_custom_call.1} parent=1 // pred_check_branch
      %269 = sbr.rel (%p266) target = $region157
    $region156: #{tpu_custom_call.1} parent=1 // pred_region
      %s285 = sand.u32 1, 7
      %p286 = scmp.eq.s32.totalorder %s285, 0
      %p287 = pneg %p286
      // Predicated region
      $region169: #{tpu_custom_call.1} parent=156 // pred_check
        _
      $region170: #{tpu_custom_call.1} parent=156 // pred_check_branch
        %289 = sbr.rel (%p286) target = $region172
      $region171: #{tpu_custom_call.1} parent=156 // pred_region
        %s290 = sand.u32 1, 7
        %s291 = ssub.s32 1, %s290
        %s292 = scalar_lea.vmem %s262, %s291
        %s293 = ssub.s32 1, %s290
        %s294 = scalar_lea.vmem %s263, %s293 [#allocation2]
        %s295 = sshll.u32 1, %s290
        %s296 = ssub.s32 %s295, 1
        loop: start=0, step=1, limit=1
        $region173: #{tpu_custom_call.1} parent=171 // loop_pre_header
          _
        $region174: #{tpu_custom_call.1} parent=171 // loop_header
          %s298 = sphi 0, %s302
          %p299 = scmp.ge.s32.totalorder %s298, 1
          %s303 = sphi %s292, %s292
          %s304 = sphi %s294, %s294
        $region175: #{tpu_custom_call.1} parent=171 // loop_header_branch
          %301 = sbr.rel (%p299) target = $region179
        $region176: #{tpu_custom_call.1} parent=171 // loop_body
          %v305 = vld [vmem:[%s303] sm:%s296]
          %306 = vst [vmem:[%s304] sm:%s296] %v305
        $region177: #{tpu_custom_call.1} parent=171 // loop_footer
          %s302 = sadd.s32 1, %s298
        $region178: #{tpu_custom_call.1} parent=171 // loop_footer_branch
          %297 = sbr.rel target = $region174
        $region179: #{tpu_custom_call.1} parent=171 // loop_exit
          _
      $region172: #{tpu_custom_call.1} parent=156 // pred_fallthru
        _
    $region157: #{tpu_custom_call.1} parent=1 // pred_fallthru
      _
    // Predicated region
    $region158: #{tpu_custom_call.1} parent=1 // pred_check
      %p270 = pneg %p266
    $region159: #{tpu_custom_call.1} parent=1 // pred_check_branch
      %272 = sbr.rel (%p270) target = $region161
    $region160: #{tpu_custom_call.1} parent=1 // pred_region
      %s273 = sshll.u32 1, 1
      %s274 = ssub.s32 %s273, 1
      loop: start=0, step=1, limit=1
      $region162: #{tpu_custom_call.1} parent=160 // loop_pre_header
        _
      $region163: #{tpu_custom_call.1} parent=160 // loop_header
        %s276 = sphi 0, %s280
        %p277 = scmp.ge.s32.totalorder %s276, 1
        %s281 = sphi %s262, %s262
        %s282 = sphi %s263, %s263
      $region164: #{tpu_custom_call.1} parent=160 // loop_header_branch
        %279 = sbr.rel (%p277) target = $region168
      $region165: #{tpu_custom_call.1} parent=160 // loop_body
        %v283 = vld [vmem:[%s281] sm:%s274]
        %284 = vst [vmem:[%s282] sm:%s274] %v283
      $region166: #{tpu_custom_call.1} parent=160 // loop_footer
        %s280 = sadd.s32 1, %s276
      $region167: #{tpu_custom_call.1} parent=160 // loop_footer_branch
        %275 = sbr.rel target = $region163
      $region168: #{tpu_custom_call.1} parent=160 // loop_exit
        _
    $region161: #{tpu_custom_call.1} parent=1 // pred_fallthru
      _
    // Predicated region
    $region180: #{tpu_custom_call.1} parent=1 // pred_check
      _
    $region181: #{tpu_custom_call.1} parent=1 // pred_check_branch
      %309 = sbr.rel (0) target = $region183
    $region182: #{tpu_custom_call.1} parent=1 // pred_region
      %310 = vsyncadd %s264, 16
    $region183: #{tpu_custom_call.1} parent=1 // pred_fallthru
      _
    %s311 = sld [smem:[#allocation8 + $0x5]]
    %s312 = scalar_lea.vmem %s5, %s311
    %s313 = scalar_lea.vmem [#allocation2], 5
    %s314 = scalar_lea.sflag [#allocation3], 5
    %p316 = scmp.lt.u32.totalorder 1, 8
    %p317 = pneg %p316
    // Predicated region
    $region184: #{tpu_custom_call.1} parent=1 // pred_check
      _
    $region185: #{tpu_custom_call.1} parent=1 // pred_check_branch
      %319 = sbr.rel (%p316) target = $region187
    $region186: #{tpu_custom_call.1} parent=1 // pred_region
      %s335 = sand.u32 1, 7
      %p336 = scmp.eq.s32.totalorder %s335, 0
      %p337 = pneg %p336
      // Predicated region
      $region199: #{tpu_custom_call.1} parent=186 // pred_check
        _
      $region200: #{tpu_custom_call.1} parent=186 // pred_check_branch
        %339 = sbr.rel (%p336) target = $region202
      $region201: #{tpu_custom_call.1} parent=186 // pred_region
        %s340 = sand.u32 1, 7
        %s341 = ssub.s32 1, %s340
        %s342 = scalar_lea.vmem %s312, %s341
        %s343 = ssub.s32 1, %s340
        %s344 = scalar_lea.vmem %s313, %s343 [#allocation2]
        %s345 = sshll.u32 1, %s340
        %s346 = ssub.s32 %s345, 1
        loop: start=0, step=1, limit=1
        $region203: #{tpu_custom_call.1} parent=201 // loop_pre_header
          _
        $region204: #{tpu_custom_call.1} parent=201 // loop_header
          %s348 = sphi 0, %s352
          %p349 = scmp.ge.s32.totalorder %s348, 1
          %s353 = sphi %s342, %s342
          %s354 = sphi %s344, %s344
        $region205: #{tpu_custom_call.1} parent=201 // loop_header_branch
          %351 = sbr.rel (%p349) target = $region209
        $region206: #{tpu_custom_call.1} parent=201 // loop_body
          %v355 = vld [vmem:[%s353] sm:%s346]
          %356 = vst [vmem:[%s354] sm:%s346] %v355
        $region207: #{tpu_custom_call.1} parent=201 // loop_footer
          %s352 = sadd.s32 1, %s348
        $region208: #{tpu_custom_call.1} parent=201 // loop_footer_branch
          %347 = sbr.rel target = $region204
        $region209: #{tpu_custom_call.1} parent=201 // loop_exit
          _
      $region202: #{tpu_custom_call.1} parent=186 // pred_fallthru
        _
    $region187: #{tpu_custom_call.1} parent=1 // pred_fallthru
      _
    // Predicated region
    $region188: #{tpu_custom_call.1} parent=1 // pred_check
      %p320 = pneg %p316
    $region189: #{tpu_custom_call.1} parent=1 // pred_check_branch
      %322 = sbr.rel (%p320) target = $region191
    $region190: #{tpu_custom_call.1} parent=1 // pred_region
      %s323 = sshll.u32 1, 1
      %s324 = ssub.s32 %s323, 1
      loop: start=0, step=1, limit=1
      $region192: #{tpu_custom_call.1} parent=190 // loop_pre_header
        _
      $region193: #{tpu_custom_call.1} parent=190 // loop_header
        %s326 = sphi 0, %s330
        %p327 = scmp.ge.s32.totalorder %s326, 1
        %s331 = sphi %s312, %s312
        %s332 = sphi %s313, %s313
      $region194: #{tpu_custom_call.1} parent=190 // loop_header_branch
        %329 = sbr.rel (%p327) target = $region198
      $region195: #{tpu_custom_call.1} parent=190 // loop_body
        %v333 = vld [vmem:[%s331] sm:%s324]
        %334 = vst [vmem:[%s332] sm:%s324] %v333
      $region196: #{tpu_custom_call.1} parent=190 // loop_footer
        %s330 = sadd.s32 1, %s326
      $region197: #{tpu_custom_call.1} parent=190 // loop_footer_branch
        %325 = sbr.rel target = $region193
      $region198: #{tpu_custom_call.1} parent=190 // loop_exit
        _
    $region191: #{tpu_custom_call.1} parent=1 // pred_fallthru
      _
    // Predicated region
    $region210: #{tpu_custom_call.1} parent=1 // pred_check
      _
    $region211: #{tpu_custom_call.1} parent=1 // pred_check_branch
      %359 = sbr.rel (0) target = $region213
    $region212: #{tpu_custom_call.1} parent=1 // pred_region
      %360 = vsyncadd %s314, 16
    $region213: #{tpu_custom_call.1} parent=1 // pred_fallthru
      _
    %s361 = sld [smem:[#allocation8 + $0x6]]
    %s362 = scalar_lea.vmem %s5, %s361
    %s363 = scalar_lea.vmem [#allocation2], 6
    %s364 = scalar_lea.sflag [#allocation3], 6
    %p366 = scmp.lt.u32.totalorder 1, 8
    %p367 = pneg %p366
    // Predicated region
    $region214: #{tpu_custom_call.1} parent=1 // pred_check
      _
    $region215: #{tpu_custom_call.1} parent=1 // pred_check_branch
      %369 = sbr.rel (%p366) target = $region217
    $region216: #{tpu_custom_call.1} parent=1 // pred_region
      %s385 = sand.u32 1, 7
      %p386 = scmp.eq.s32.totalorder %s385, 0
      %p387 = pneg %p386
      // Predicated region
      $region229: #{tpu_custom_call.1} parent=216 // pred_check
        _
      $region230: #{tpu_custom_call.1} parent=216 // pred_check_branch
        %389 = sbr.rel (%p386) target = $region232
      $region231: #{tpu_custom_call.1} parent=216 // pred_region
        %s390 = sand.u32 1, 7
        %s391 = ssub.s32 1, %s390
        %s392 = scalar_lea.vmem %s362, %s391
        %s393 = ssub.s32 1, %s390
        %s394 = scalar_lea.vmem %s363, %s393 [#allocation2]
        %s395 = sshll.u32 1, %s390
        %s396 = ssub.s32 %s395, 1
        loop: start=0, step=1, limit=1
        $region233: #{tpu_custom_call.1} parent=231 // loop_pre_header
          _
        $region234: #{tpu_custom_call.1} parent=231 // loop_header
          %s398 = sphi 0, %s402
          %p399 = scmp.ge.s32.totalorder %s398, 1
          %s403 = sphi %s392, %s392
          %s404 = sphi %s394, %s394
        $region235: #{tpu_custom_call.1} parent=231 // loop_header_branch
          %401 = sbr.rel (%p399) target = $region239
        $region236: #{tpu_custom_call.1} parent=231 // loop_body
          %v405 = vld [vmem:[%s403] sm:%s396]
          %406 = vst [vmem:[%s404] sm:%s396] %v405
        $region237: #{tpu_custom_call.1} parent=231 // loop_footer
          %s402 = sadd.s32 1, %s398
        $region238: #{tpu_custom_call.1} parent=231 // loop_footer_branch
          %397 = sbr.rel target = $region234
        $region239: #{tpu_custom_call.1} parent=231 // loop_exit
          _
      $region232: #{tpu_custom_call.1} parent=216 // pred_fallthru
        _
    $region217: #{tpu_custom_call.1} parent=1 // pred_fallthru
      _
    // Predicated region
    $region218: #{tpu_custom_call.1} parent=1 // pred_check
      %p370 = pneg %p366
    $region219: #{tpu_custom_call.1} parent=1 // pred_check_branch
      %372 = sbr.rel (%p370) target = $region221
    $region220: #{tpu_custom_call.1} parent=1 // pred_region
      %s373 = sshll.u32 1, 1
      %s374 = ssub.s32 %s373, 1
      loop: start=0, step=1, limit=1
      $region222: #{tpu_custom_call.1} parent=220 // loop_pre_header
        _
      $region223: #{tpu_custom_call.1} parent=220 // loop_header
        %s376 = sphi 0, %s380
        %p377 = scmp.ge.s32.totalorder %s376, 1
        %s381 = sphi %s362, %s362
        %s382 = sphi %s363, %s363
      $region224: #{tpu_custom_call.1} parent=220 // loop_header_branch
        %379 = sbr.rel (%p377) target = $region228
      $region225: #{tpu_custom_call.1} parent=220 // loop_body
        %v383 = vld [vmem:[%s381] sm:%s374]
        %384 = vst [vmem:[%s382] sm:%s374] %v383
      $region226: #{tpu_custom_call.1} parent=220 // loop_footer
        %s380 = sadd.s32 1, %s376
      $region227: #{tpu_custom_call.1} parent=220 // loop_footer_branch
        %375 = sbr.rel target = $region223
      $region228: #{tpu_custom_call.1} parent=220 // loop_exit
        _
    $region221: #{tpu_custom_call.1} parent=1 // pred_fallthru
      _
    // Predicated region
    $region240: #{tpu_custom_call.1} parent=1 // pred_check
      _
    $region241: #{tpu_custom_call.1} parent=1 // pred_check_branch
      %409 = sbr.rel (0) target = $region243
    $region242: #{tpu_custom_call.1} parent=1 // pred_region
      %410 = vsyncadd %s364, 16
    $region243: #{tpu_custom_call.1} parent=1 // pred_fallthru
      _
    %s411 = sld [smem:[#allocation8 + $0x7]]
    %s412 = scalar_lea.vmem %s5, %s411
    %s413 = scalar_lea.vmem [#allocation2], 7
    %s414 = scalar_lea.sflag [#allocation3], 7
    %p416 = scmp.lt.u32.totalorder 1, 8
    %p417 = pneg %p416
    // Predicated region
    $region244: #{tpu_custom_call.1} parent=1 // pred_check
      _
    $region245: #{tpu_custom_call.1} parent=1 // pred_check_branch
      %419 = sbr.rel (%p416) target = $region247
    $region246: #{tpu_custom_call.1} parent=1 // pred_region
      %s435 = sand.u32 1, 7
      %p436 = scmp.eq.s32.totalorder %s435, 0
      %p437 = pneg %p436
      // Predicated region
      $region259: #{tpu_custom_call.1} parent=246 // pred_check
        _
      $region260: #{tpu_custom_call.1} parent=246 // pred_check_branch
        %439 = sbr.rel (%p436) target = $region262
      $region261: #{tpu_custom_call.1} parent=246 // pred_region
        %s440 = sand.u32 1, 7
        %s441 = ssub.s32 1, %s440
        %s442 = scalar_lea.vmem %s412, %s441
        %s443 = ssub.s32 1, %s440
        %s444 = scalar_lea.vmem %s413, %s443 [#allocation2]
        %s445 = sshll.u32 1, %s440
        %s446 = ssub.s32 %s445, 1
        loop: start=0, step=1, limit=1
        $region263: #{tpu_custom_call.1} parent=261 // loop_pre_header
          _
        $region264: #{tpu_custom_call.1} parent=261 // loop_header
          %s448 = sphi 0, %s452
          %p449 = scmp.ge.s32.totalorder %s448, 1
          %s453 = sphi %s442, %s442
          %s454 = sphi %s444, %s444
        $region265: #{tpu_custom_call.1} parent=261 // loop_header_branch
          %451 = sbr.rel (%p449) target = $region269
        $region266: #{tpu_custom_call.1} parent=261 // loop_body
          %v455 = vld [vmem:[%s453] sm:%s446]
          %456 = vst [vmem:[%s454] sm:%s446] %v455
        $region267: #{tpu_custom_call.1} parent=261 // loop_footer
          %s452 = sadd.s32 1, %s448
        $region268: #{tpu_custom_call.1} parent=261 // loop_footer_branch
          %447 = sbr.rel target = $region264
        $region269: #{tpu_custom_call.1} parent=261 // loop_exit
          _
      $region262: #{tpu_custom_call.1} parent=246 // pred_fallthru
        _
    $region247: #{tpu_custom_call.1} parent=1 // pred_fallthru
      _
    // Predicated region
    $region248: #{tpu_custom_call.1} parent=1 // pred_check
      %p420 = pneg %p416
    $region249: #{tpu_custom_call.1} parent=1 // pred_check_branch
      %422 = sbr.rel (%p420) target = $region251
    $region250: #{tpu_custom_call.1} parent=1 // pred_region
      %s423 = sshll.u32 1, 1
      %s424 = ssub.s32 %s423, 1
      loop: start=0, step=1, limit=1
      $region252: #{tpu_custom_call.1} parent=250 // loop_pre_header
        _
      $region253: #{tpu_custom_call.1} parent=250 // loop_header
        %s426 = sphi 0, %s430
        %p427 = scmp.ge.s32.totalorder %s426, 1
        %s431 = sphi %s412, %s412
        %s432 = sphi %s413, %s413
      $region254: #{tpu_custom_call.1} parent=250 // loop_header_branch
        %429 = sbr.rel (%p427) target = $region258
      $region255: #{tpu_custom_call.1} parent=250 // loop_body
        %v433 = vld [vmem:[%s431] sm:%s424]
        %434 = vst [vmem:[%s432] sm:%s424] %v433
      $region256: #{tpu_custom_call.1} parent=250 // loop_footer
        %s430 = sadd.s32 1, %s426
      $region257: #{tpu_custom_call.1} parent=250 // loop_footer_branch
        %425 = sbr.rel target = $region253
      $region258: #{tpu_custom_call.1} parent=250 // loop_exit
        _
    $region251: #{tpu_custom_call.1} parent=1 // pred_fallthru
      _
    // Predicated region
    $region270: #{tpu_custom_call.1} parent=1 // pred_check
      _
    $region271: #{tpu_custom_call.1} parent=1 // pred_check_branch
      %459 = sbr.rel (0) target = $region273
    $region272: #{tpu_custom_call.1} parent=1 // pred_region
      %460 = vsyncadd %s414, 16
    $region273: #{tpu_custom_call.1} parent=1 // pred_fallthru
      _
    %v461 = vld [vmem:[#allocation4] sm:$0xff]
    %v462 = vld [vmem:[#allocation9] sm:$0xff]
    %v463 = vld [vmem:[%s2] sm:$0xff]
    %v464 = vld [vmem:[%s3] sm:$0x1]
    %vm465 = vcmask 130048
    %v466 = vsel %vm465, %v461, -inf
    %467 = vmax.xlane.f32.xlu0 %v466
    %v468 = vpop.xlane.xlu0 %467
    %v469 = vsub.f32 %v461, %v468
    %v470 = vmul.f32 %v469, 1.442695
    %v471 = vpow.pop %v470
    %v472 = vsel %vm465, %v471, 0.0
    %473 = vadd.xlane.f32.xlu0 %v472
    %v474 = vpop.xlane.xlu0 %473
    %v475 = vrcp.pop %v474
    %v476 = vmul.f32 %v471, %v475
    %v477 = vsel %vm465, %v476, -inf
    %478 = vmax.xlane.f32.xlu0 %v477
    %v479 = vpop.xlane.xlu0 %478
    %v480 = vsub.f32 %v476, %v479
    %v481 = vmul.f32 %v480, 1.442695
    %v482 = vpow.pop %v481
    %v483 = vsel %vm465, %v482, 0.0
    %484 = vadd.xlane.f32.xlu0 %v483
    %v485 = vpop.xlane.xlu0 %484
    %v486 = vlog2.pop %v485
    %v487 = vmul.f32 %v486, 0.6931472
    %v488 = vsub.f32 %v480, %v487
    %v489 = vlaneseq
    %v490 = vand.u32 %v489, 127
    %491 = vset.pattern.permute.xlu0 0
    %492 = vperm.xlu0 %491, %v463
    %v493 = vpop.permute.xlu0 %492
    %vm494 = vcmp.eq.s32.totalorder %v490, %v493
    %v495 = vsel %vm494, %v488, 0.0
    %v496 = vsel %vm465, %v495, 0.0
    %497 = vadd.xlane.f32.xlu0 %v496
    %v498 = vpop.xlane.xlu0 %497
    %v499 = vsel %vm465, %v488, 0.0
    %500 = vadd.xlane.f32.xlu0 %v499
    %v501 = vpop.xlane.xlu0 %500
    %vm502 = vcmask 7168
    %v503 = vsel %vm502, %v498, 0.0
    %504 = vadd.xlane.f32.xlu0 %v503
    %v505 = vpop.xlane.xlu0 %504
    %v506 = vrot.slane %v505, 4
    %v507 = vadd.f32 %v505, %v506
    %v508 = vrot.slane %v507, 2
    %v509 = vadd.f32 %v507, %v508
    %v510 = vrot.slane %v509, 1
    %v511 = vadd.f32 %v509, %v510
    %s512 = vtos %v511
    %v513 = vstv %s512
    %v514 = vmul.f32 %v513, 0.9
    %v515 = vsel %vm502, %v501, 0.0
    %516 = vadd.xlane.f32.xlu0 %v515
    %v517 = vpop.xlane.xlu0 %516
    %v518 = vrot.slane %v517, 4
    %v519 = vadd.f32 %v517, %v518
    %v520 = vrot.slane %v519, 2
    %v521 = vadd.f32 %v519, %v520
    %v522 = vrot.slane %v521, 1
    %v523 = vadd.f32 %v521, %v522
    %s524 = vtos %v523
    %v525 = vstv %s524
    %v526 = vmul.f32 %v525, 0.00625
    %v527 = vadd.f32 %v514, %v526
    %v528 = vsub.f32 0.0, %v527
    %v529 = vrcp.pop 8.0
    %v530 = vmul.f32 %v528, %v529
    %vm531 = vcmask 0
    %532 = vst.msk [vmem:[#allocation11] sm:$0x1] %vm531, %v530
    %v533 = vmul.f32 %v462, %v462
    %vm534 = vcmask 261120
    %v535 = vsel %vm534, %v533, 0.0
    %536 = vadd.xlane.f32.xlu0 %v535
    %v537 = vpop.xlane.xlu0 %536
    %v539 = vsel %vm534, %v462, 0
    %541 = vmatprep.subr.mxu0 0.0
    %542 = vmatpush1.xpose.msra.mxu0 0.0
    %543 = vmatprep.subr.mxu0 0.0
    %544 = vmatpush1.xpose.msra.mxu0 0.0
    %545 = vmatprep.subr.mxu0 0.0
    %546 = vmatpush1.xpose.msra.mxu0 0.0
    %547 = vmatprep.subr.mxu0 0.0
    %548 = vmatpush1.xpose.msra.mxu0 0.0
    %549 = vmatprep.subr.mxu0 0.0
    %550 = vmatpush1.xpose.msra.mxu0 0.0
    %551 = vmatprep.subr.mxu0 0.0
    %552 = vmatpush1.xpose.msra.mxu0 0.0
    %553 = vmatprep.subr.mxu0 0.0
    %554 = vmatpush1.xpose.msra.mxu0 0.0
    %555 = vmatprep.subr.mxu0 0.0
    %556 = vmatpush1.xpose.msra.mxu0 0.0
    %557 = vmatprep.subr.mxu0 0.0
    %558 = vmatpush1.xpose.msra.mxu0 0.0
    %559 = vmatprep.subr.mxu0 0.0
    %560 = vmatpush1.xpose.msra.mxu0 0.0
    %561 = vmatprep.subr.mxu0 0.0
    %562 = vmatpush1.xpose.msra.mxu0 0.0
    %563 = vmatprep.subr.mxu0 0.0
    %564 = vmatpush1.xpose.msra.mxu0 0.0
    %565 = vmatprep.subr.mxu0 0.0
    %566 = vmatpush1.xpose.msra.mxu0 0.0
    %567 = vmatprep.subr.mxu0 0.0
    %568 = vmatpush1.xpose.msra.mxu0 0.0
    %569 = vmatprep.subr.mxu0 0.0
    %570 = vmatpush1.xpose.msra.mxu0 0.0
    %571 = vmatprep.subr.mxu0 0.0
    %572 = vmatpush1.xpose.msra.mxu0 %v539
    %573 = vmatprep.subr.mxu0 0.0
    %574 = vmatpush2.xpose.msra.mxu0 0.0
    %575 = vmatprep.subr.mxu0 0.0
    %576 = vmatpush2.xpose.msra.mxu0 0.0
    %577 = vmatprep.subr.mxu0 0.0
    %578 = vmatpush2.xpose.msra.mxu0 0.0
    %579 = vmatprep.subr.mxu0 0.0
    %580 = vmatpush2.xpose.msra.mxu0 0.0
    %581 = vmatprep.subr.mxu0 0.0
    %582 = vmatpush2.xpose.msra.mxu0 0.0
    %583 = vmatprep.subr.mxu0 0.0
    %584 = vmatpush2.xpose.msra.mxu0 0.0
    %585 = vmatprep.subr.mxu0 0.0
    %586 = vmatpush2.xpose.msra.mxu0 0.0
    %587 = vmatprep.subr.mxu0 0.0
    %588 = vmatpush2.xpose.msra.mxu0 0.0
    %589 = vmatprep.subr.mxu0 0.0
    %590 = vmatpush2.xpose.msra.mxu0 0.0
    %591 = vmatprep.subr.mxu0 0.0
    %592 = vmatpush2.xpose.msra.mxu0 0.0
    %593 = vmatprep.subr.mxu0 0.0
    %594 = vmatpush2.xpose.msra.mxu0 0.0
    %595 = vmatprep.subr.mxu0 0.0
    %596 = vmatpush2.xpose.msra.mxu0 0.0
    %597 = vmatprep.subr.mxu0 0.0
    %598 = vmatpush2.xpose.msra.mxu0 0.0
    %599 = vmatprep.subr.mxu0 0.0
    %600 = vmatpush2.xpose.msra.mxu0 0.0
    %601 = vmatprep.subr.mxu0 0.0
    %602 = vmatpush2.xpose.msra.mxu0 0.0
    %603 = vmatprep.subr.mxu0 0.0
    %604 = vmatpush2.xpose.msra.mxu0 0.0
    %605 = vmatprep.mubr.f32.mxu0 0.0
    %606 = vmatmul.mubr.f32.gmra.mxu0 %v539
    %v607 = vpop.f32.mrf.mxu0
    %v608 = vadd.f32 0.0, %v607
    %v609 = vpop.f32.mrf.mxu0
    %610 = vdwg.mxu0
    %611 = vxpose.xlu0.b32.start [1/16] %v537, 128
    %612 = vxpose.xlu0.b32.cont [2/16] 0.0, 128
    %613 = vxpose.xlu0.b32.cont [3/16] 0.0, 128
    %614 = vxpose.xlu0.b32.cont [4/16] 0.0, 128
    %615 = vxpose.xlu0.b32.cont [5/16] 0.0, 128
    %616 = vxpose.xlu0.b32.cont [6/16] 0.0, 128
    %617 = vxpose.xlu0.b32.cont [7/16] 0.0, 128
    %618 = vxpose.xlu0.b32.cont [8/16] 0.0, 128
    %619 = vxpose.xlu0.b32.cont [9/16] 0.0, 128
    %620 = vxpose.xlu0.b32.cont [10/16] 0.0, 128
    %621 = vxpose.xlu0.b32.cont [11/16] 0.0, 128
    %622 = vxpose.xlu0.b32.cont [12/16] 0.0, 128
    %623 = vxpose.xlu0.b32.cont [13/16] 0.0, 128
    %624 = vxpose.xlu0.b32.cont [14/16] 0.0, 128
    %625 = vxpose.xlu0.b32.cont [15/16] 0.0, 128
    %626 = vxpose.xlu0.b32.end [16/16] 0.0, 128
    %v627 = vpop.trf.xlu0
    %v628 = vpop.trf.xlu0
    %v629 = vpop.trf.xlu0
    %v630 = vpop.trf.xlu0
    %v631 = vpop.trf.xlu0
    %v632 = vpop.trf.xlu0
    %v633 = vpop.trf.xlu0
    %v634 = vpop.trf.xlu0
    %v635 = vpop.trf.xlu0
    %v636 = vpop.trf.xlu0
    %v637 = vpop.trf.xlu0
    %v638 = vpop.trf.xlu0
    %v639 = vpop.trf.xlu0
    %v640 = vpop.trf.xlu0
    %v641 = vpop.trf.xlu0
    %v642 = vpop.trf.xlu0
    %v643 = vlaneseq
    %v644 = vshrl.u32 %v643, 7
    %v645 = vsub.s32 0, %v644
    %v646 = vrot.slane %v627, %v645
    %v647 = vadd.f32 %v537, %v646
    %v648 = vmul.f32 %v608, 2.0
    %v649 = vsub.f32 %v647, %v648
    %v650 = vmax.f32 %v649, 1e-12
    %v651 = vrsqrt.pop %v650
    %v652 = vmul.f32 %v650, %v651
    %vm653 = vcmp.eq.f32.partialorder %v650, inf
    %v654 = vsel %vm653, %v650, %v652
    %vm655 = vcmp.eq.f32.partialorder %v650, 0.0
    %v656 = vand.u32 %v650, 2147483648
    %v657 = vsel %vm655, %v656, %v654
    %v658 = vlaneseq
    %v659 = vshrl.u32 %v658, 7
    %v660 = vsub.s32 0, %v659
    %v661 = vrot.slane %v464, %v660
    %vm662 = vcmp.eq.s32.totalorder %v493, %v661
    %v663 = vsel %vm662, %v657, -inf
    %vm664 = vcmask 64512
    %v665 = vsel %vm664, %v663, -inf
    %666 = vmax.xlane.f32.xlu0 %v665
    %v667 = vpop.xlane.xlu0 %666
    %v668 = vsel %vm662, inf, %v657
    %v669 = vsel %vm664, %v668, inf
    %670 = vmin.xlane.f32.xlu0 %v669
    %v671 = vpop.xlane.xlu0 %670
    %v672 = vsub.f32 %v667, %v671
    %v673 = vadd.f32 %v672, 0.3
    %v674 = vmax.f32 %v673, 0.0
    %v675 = vsel %vm502, %v674, 0.0
    %676 = vadd.xlane.f32.xlu0 %v675
    %v677 = vpop.xlane.xlu0 %676
    %v678 = vrot.slane %v677, 4
    %v679 = vadd.f32 %v677, %v678
    %v680 = vrot.slane %v679, 2
    %v681 = vadd.f32 %v679, %v680
    %v682 = vrot.slane %v681, 1
    %v683 = vadd.f32 %v681, %v682
    %s684 = vtos %v683
    %v685 = vstv %s684
    %v686 = vmul.f32 %v685, %v529
    %687 = vst.msk [vmem:[#allocation12] sm:$0x1] %vm531, %v686
    %s688 = smul.u32 1, 1
    %s689 = sshll.u32 %s688, 4
    %690 = dma.done [#allocation3], %s689
    %s691 = sshll.u32 %s688, 4
    %692 = dma.done %s114, %s691
    %s693 = sshll.u32 %s688, 4
    %694 = dma.done %s164, %s693
    %s695 = sshll.u32 %s688, 4
    %696 = dma.done %s214, %s695
    %s697 = sshll.u32 %s688, 4
    %698 = dma.done %s264, %s697
    %s699 = sshll.u32 %s688, 4
    %700 = dma.done %s314, %s699
    %s701 = sshll.u32 %s688, 4
    %702 = dma.done %s364, %s701
    %s703 = sshll.u32 %s688, 4
    %704 = dma.done %s414, %s703
    %v705 = vld [vmem:[#allocation2] sm:$0xff]
    %v706 = vsub.f32 %v462, %v705
    %v707 = vmul.f32 %v706, %v706
    %v708 = vsel %vm534, %v707, 0.0
    %709 = vadd.xlane.f32.xlu0 %v708
    %v710 = vpop.xlane.xlu0 %709
    %v711 = vmax.f32 %v710, 1e-12
    %v712 = vmin.f32 %v711, 1e+12
    %v713 = vsel %vm502, %v712, 0.0
    %714 = vadd.xlane.f32.xlu0 %v713
    %v715 = vpop.xlane.xlu0 %714
    %v716 = vrot.slane %v715, 4
    %v717 = vadd.f32 %v715, %v716
    %v718 = vrot.slane %v717, 2
    %v719 = vadd.f32 %v717, %v718
    %v720 = vrot.slane %v719, 1
    %v721 = vadd.f32 %v719, %v720
    %s722 = vtos %v721
    %v723 = vstv %s722
    %v724 = vmul.f32 %v723, %v529
    %v725 = vadd.f32 %v724, 1.5e-11
    %v726 = vmul.f32 %v725, 0.0005
    %727 = vst.msk [vmem:[#allocation14] sm:$0x1] %vm531, %v726
    // Predicated region
    $region274: #{tpu_custom_call.1} parent=1 // pred_check
      _
    $region275: #{tpu_custom_call.1} parent=1 // pred_check_branch
      %729 = sbr.rel (0) target = $region277
    $region276: #{tpu_custom_call.1} parent=1 // pred_region
      %s731 = ssub.s32 16, 16
      %732 = vsyncadd [#allocation6], %s731
      %s734 = sshll.u32 [#allocation11], 4
      %s735 = int_to_ptr.vmem [resolvable:$true] %s734
      %737 = dma.vmem_to_hbm [thread:$0]  %s735, 16, %s6, [#allocation6]
    $region277: #{tpu_custom_call.1} parent=1 // pred_fallthru
      _
    // Predicated region
    $region278: #{tpu_custom_call.1} parent=1 // pred_check
      _
    $region279: #{tpu_custom_call.1} parent=1 // pred_check_branch
      %739 = sbr.rel (0) target = $region281
    $region280: #{tpu_custom_call.1} parent=1 // pred_region
      %s741 = ssub.s32 16, 16
      %742 = vsyncadd [#allocation13], %s741
      %s744 = sshll.u32 [#allocation12], 4
      %s745 = int_to_ptr.vmem [resolvable:$true] %s744
      %747 = dma.vmem_to_hbm [thread:$0]  %s745, 16, %s7, [#allocation13]
    $region281: #{tpu_custom_call.1} parent=1 // pred_fallthru
      _
    // Predicated region
    $region282: #{tpu_custom_call.1} parent=1 // pred_check
      _
    $region283: #{tpu_custom_call.1} parent=1 // pred_check_branch
      %749 = sbr.rel (0) target = $region285
    $region284: #{tpu_custom_call.1} parent=1 // pred_region
      %s751 = ssub.s32 16, 16
      %752 = vsyncadd [#allocation13], %s751
      %s754 = sshll.u32 [#allocation14], 4
      %s755 = int_to_ptr.vmem [resolvable:$true] %s754
      %757 = dma.vmem_to_hbm [thread:$0]  %s755, 16, %s8, [#allocation13]
    $region285: #{tpu_custom_call.1} parent=1 // pred_fallthru
      _
    // Predicated region
    $region286: #{tpu_custom_call.1} parent=1 // pred_check
      _
    $region287: #{tpu_custom_call.1} parent=1 // pred_check_branch
      %759 = sbr.rel (0) target = $region289
    $region288: #{tpu_custom_call.1} parent=1 // pred_region
      %760 = dma.done [#allocation6], 16
    $region289: #{tpu_custom_call.1} parent=1 // pred_fallthru
      _
    // Predicated region
    $region290: #{tpu_custom_call.1} parent=1 // pred_check
      _
    $region291: #{tpu_custom_call.1} parent=1 // pred_check_branch
      %762 = sbr.rel (0) target = $region293
    $region292: #{tpu_custom_call.1} parent=1 // pred_region
      %763 = dma.done [#allocation13], 16
    $region293: #{tpu_custom_call.1} parent=1 // pred_fallthru
      _
    // Predicated region
    $region294: #{tpu_custom_call.1} parent=1 // pred_check
      _
    $region295: #{tpu_custom_call.1} parent=1 // pred_check_branch
      %765 = sbr.rel (0) target = $region297
    $region296: #{tpu_custom_call.1} parent=1 // pred_region
      %766 = dma.done [#allocation13], 16
    $region297: #{tpu_custom_call.1} parent=1 // pred_fallthru
      _
    %767 = vsyncpa [#allocation5], 1
    %768 = vsyncpa [#allocation10], 1
    %769 = vsyncpa [#allocation6], 1
    %770 = vsyncpa [#allocation13], 1
    %771 = vsyncpa [#allocation7], 1
  %772 = vsyncmov [#allocation3]
  %s773 = vpop.sfrf %772
  %p774 = scmp.eq.s32.totalorder %s773, 0
  %p775 = pneg %p774
  %777 = shalt.err (%p775)
  %s778 = scalar_lea.sflag [#allocation3], 1
  %779 = vsyncmov %s778
  %s780 = vpop.sfrf %779
  %p781 = scmp.eq.s32.totalorder %s780, 0
  %p782 = pneg %p781
  %784 = shalt.err (%p782)
  %s785 = scalar_lea.sflag [#allocation3], 2
  %786 = vsyncmov %s785
  %s787 = vpop.sfrf %786
  %p788 = scmp.eq.s32.totalorder %s787, 0
  %p789 = pneg %p788
  %791 = shalt.err (%p789)
  %s792 = scalar_lea.sflag [#allocation3], 3
  %793 = vsyncmov %s792
  %s794 = vpop.sfrf %793
  %p795 = scmp.eq.s32.totalorder %s794, 0
  %p796 = pneg %p795
  %798 = shalt.err (%p796)
  %s799 = scalar_lea.sflag [#allocation3], 4
  %800 = vsyncmov %s799
  %s801 = vpop.sfrf %800
  %p802 = scmp.eq.s32.totalorder %s801, 0
  %p803 = pneg %p802
  %805 = shalt.err (%p803)
  %s806 = scalar_lea.sflag [#allocation3], 5
  %807 = vsyncmov %s806
  %s808 = vpop.sfrf %807
  %p809 = scmp.eq.s32.totalorder %s808, 0
  %p810 = pneg %p809
  %812 = shalt.err (%p810)
  %s813 = scalar_lea.sflag [#allocation3], 6
  %814 = vsyncmov %s813
  %s815 = vpop.sfrf %814
  %p816 = scmp.eq.s32.totalorder %s815, 0
  %p817 = pneg %p816
  %819 = shalt.err (%p817)
  %s820 = scalar_lea.sflag [#allocation3], 7
  %821 = vsyncmov %s820
  %s822 = vpop.sfrf %821
  %p823 = scmp.eq.s32.totalorder %s822, 0
  %p824 = pneg %p823
  %826 = shalt.err (%p824)

</llo_original>
